<compile_context>
chip_gen: v7x
topology: tpu7x:2x2x1
jax: 0.10.0
libtpu: 0.0.40
codegen_flags: <defaults>
</compile_context>

<pallas_src>
import functools
import math

import jax
import jax.numpy as jnp
from jax.experimental import pallas as pl
from jax.experimental.pallas import tpu as pltpu


def _layernorm(z, w, b, eps=1e-5):
    # f32 elementwise math regardless of weight dtype.
    mu = jnp.mean(z, axis=-1, keepdims=True)
    var = jnp.mean((z - mu) ** 2, axis=-1, keepdims=True)
    return (z - mu) * jax.lax.rsqrt(var + eps) * w + b


def fused_encoder_kernel(x_ref, wqkv_ref, bqkv_ref, wo_ref, bo_ref,
                         ln1_w_ref, ln1_b_ref, ln2_w_ref, ln2_b_ref,
                         w1_ref, b1_ref, w2_ref, b2_ref,
                         o_ref, acc_ref, attn_ref, *, nhead):
    layer = pl.program_id(1)
    Bb, N, D = acc_ref.shape
    hd = D // nhead
    scale = 1.0 / math.sqrt(hd)
    wdtype = wqkv_ref.dtype  # matmul input dtype (f32 or bf16); accumulation is f32

    # Load the input block into the VMEM-resident activation carry on the first layer.
    @pl.when(layer == 0)
    def _():
        acc_ref[...] = x_ref[...].astype(jnp.float32)

    x = acc_ref[...]                      # (Bb, N, D) f32, resident across the layer axis
    x2d = x.reshape(Bb * N, D)            # fold batch into M for all projections

    # ---- QKV projection: one fat (Bb*N, D) x (D, 3D) MXU matmul (pre-transposed W) ----
    qkv = jnp.dot(x2d.astype(wdtype), wqkv_ref[...],
                  preferred_element_type=jnp.float32) + bqkv_ref[...]
    q = (qkv[:, :D] * scale).reshape(Bb, N, D)      # fold 1/sqrt(hd) into q
    k = qkv[:, D:2 * D].reshape(Bb, N, D)
    v = qkv[:, 2 * D:].reshape(Bb, N, D)

    # ---- multi-head attention: batched (over Bb) matmuls per head; head outputs are
    #      written straight into a VMEM scratch slab (no lane-axis concatenate) ----
    for h in range(nhead):                # static python loop, nhead small & fixed
        lo, hi = h * hd, (h + 1) * hd
        qh = q[:, :, lo:hi]
        kh = k[:, :, lo:hi]
        vh = v[:, :, lo:hi]
        s = jnp.einsum('bnd,bmd->bnm', qh, kh,
                       preferred_element_type=jnp.float32)          # (Bb, N, N)
        s = s - jnp.max(s, axis=-1, keepdims=True)
        p = jnp.exp(s)
        p = p * pl.reciprocal(jnp.sum(p, axis=-1, keepdims=True), approx=True)
        attn_ref[:, :, lo:hi] = jnp.einsum('bnm,bmd->bnd', p, vh,
                                           preferred_element_type=jnp.float32)

    attn = attn_ref[...].reshape(Bb * N, D)
    attn = jnp.dot(attn.astype(wdtype), wo_ref[...],
                   preferred_element_type=jnp.float32) + bo_ref[...]

    # ---- residual + LayerNorm 1 ----
    y = _layernorm(x2d + attn, ln1_w_ref[...], ln1_b_ref[...])

    # ---- feed-forward (ReLU) ----
    h1 = jnp.dot(y.astype(wdtype), w1_ref[...],
                 preferred_element_type=jnp.float32) + b1_ref[...]
    h1 = jnp.maximum(h1, 0.0)
    h2 = jnp.dot(h1.astype(wdtype), w2_ref[...],
                 preferred_element_type=jnp.float32) + b2_ref[...]

    # ---- residual + LayerNorm 2 ----
    z = _layernorm(y + h2, ln2_w_ref[...], ln2_b_ref[...])
    acc_ref[...] = z.reshape(Bb, N, D)

    # Write the HBM output block only after the final layer (output block is revisited
    # across the "arbitrary" layer axis and flushed when the batch block changes).
    @pl.when(layer == pl.num_programs(1) - 1)
    def _():
        o_ref[...] = acc_ref[...].astype(o_ref.dtype)


def transformer_encoder(x, params, nhead):
    """Fused multi-layer transformer encoder. params hold layer-stacked, pre-transposed weights."""
    B, N, D = x.shape
    L = params["wqkv"].shape[0]
    F = params["w1"].shape[2]
    assert params["wqkv"].shape == (L, D, 3 * D)
    assert D % nhead == 0

    # Whole batch per grid step for small problems (lane-/sublane-dense slab, one launch).
    # For large B, pick Bb so that Bb*N >= 128 and the block still fits VMEM.
    Bb = B
    assert B % Bb == 0
    nb = B // Bb

    def wspec(arr):
        shp = arr.shape
        # Squeeze the leading layer axis; index it by the layer grid coordinate.
        return pl.BlockSpec((None,) + tuple(shp[1:]),
                            lambda b, l: (l,) + (0,) * (len(shp) - 1))

    in_specs = [
        pl.BlockSpec((Bb, N, D), lambda b, l: (b, 0, 0)),   # x
        wspec(params["wqkv"]), wspec(params["bqkv"]),       # in_proj (pre-transposed)
        wspec(params["wo"]), wspec(params["bo"]),           # out_proj (input-major)
        wspec(params["ln1_w"]), wspec(params["ln1_b"]),
        wspec(params["ln2_w"]), wspec(params["ln2_b"]),
        wspec(params["w1"]), wspec(params["b1"]),           # linear1 (D, F)
        wspec(params["w2"]), wspec(params["b2"]),           # linear2 (F, D)
    ]
    out_specs = pl.BlockSpec((Bb, N, D), lambda b, l: (b, 0, 0))

    # VMEM budget from the actual footprint (double-buffered weights + activations).
    wbytes = jnp.dtype(params["wqkv"].dtype).itemsize
    per_layer_w = (D * 3 * D + 3 * D + D * D + D + 4 * D + D * F + F + F * D + D)
    footprint = (2 * per_layer_w * wbytes            # double-buffered layer weights
                 + 4 * Bb * N * D * 4                # x/out blocks + 2 VMEM scratches
                 + Bb * N * F * 4)                   # FFN hidden
    vmem_limit = int(min(64 << 20, max(32 << 20, 2 * footprint + (4 << 20))))

    return pl.pallas_call(
        functools.partial(fused_encoder_kernel, nhead=nhead),
        out_shape=jax.ShapeDtypeStruct((B, N, D), x.dtype),
        grid=(nb, L),
        in_specs=in_specs,
        out_specs=out_specs,
        scratch_shapes=[pltpu.VMEM((Bb, N, D), jnp.float32),   # activation carry
                        pltpu.VMEM((Bb, N, D), jnp.float32)],  # attention head slab
        compiler_params=pltpu.CompilerParams(
            dimension_semantics=("parallel", "arbitrary"),
            vmem_limit_bytes=vmem_limit),
    )(x, params["wqkv"], params["bqkv"], params["wo"], params["bo"],
      params["ln1_w"], params["ln1_b"], params["ln2_w"], params["ln2_b"],
      params["w1"], params["b1"], params["w2"], params["b2"])


def init_encoder_params(key, num_layers, d_model, dim_feedforward,
                        param_dtype=jnp.float32):
    """Layer-stacked, pre-transposed weights (store W.T of the PyTorch (out,in) layout)."""
    D, F, L = d_model, dim_feedforward, num_layers
    ks = jax.random.split(key, 4 * L)
    s = 0.02

    def rnd(k, shape):
        return (s * jax.random.normal(k, shape, jnp.float32)).astype(param_dtype)

    wqkv = jnp.stack([rnd(ks[4 * i + 0], (D, 3 * D)) for i in range(L)])
    wo = jnp.stack([rnd(ks[4 * i + 1], (D, D)) for i in range(L)])
    w1 = jnp.stack([rnd(ks[4 * i + 2], (D, F)) for i in range(L)])
    w2 = jnp.stack([rnd(ks[4 * i + 3], (F, D)) for i in range(L)])

    zeros = lambda shape: jnp.zeros((L,) + shape, jnp.float32)
    ones = lambda shape: jnp.ones((L,) + shape, jnp.float32)
    return {
        "wqkv": wqkv, "bqkv": zeros((1, 3 * D)),
        "wo": wo, "bo": zeros((1, D)),
        "ln1_w": ones((1, D)), "ln1_b": zeros((1, D)),
        "ln2_w": ones((1, D)), "ln2_b": zeros((1, D)),
        "w1": w1, "b1": zeros((1, F)),
        "w2": w2, "b2": zeros((1, D)),
    }


def reference_forward(x, params, nhead):
    """Pure-JAX reference of the same post-norm encoder stack (eval mode)."""
    B, N, D = x.shape
    L = params["wqkv"].shape[0]
    hd = D // nhead

    def ln(z, w, b, eps=1e-5):
        mu = z.mean(-1, keepdims=True)
        var = ((z - mu) ** 2).mean(-1, keepdims=True)
        return (z - mu) / jnp.sqrt(var + eps) * w + b

    y = x.astype(jnp.float32)
    for l in range(L):
        qkv = y @ params["wqkv"][l].astype(jnp.float32) + params["bqkv"][l]
        q, k, v = qkv[..., :D], qkv[..., D:2 * D], qkv[..., 2 * D:]
        q = q.reshape(B, N, nhead, hd).transpose(0, 2, 1, 3) / math.sqrt(hd)
        k = k.reshape(B, N, nhead, hd).transpose(0, 2, 1, 3)
        v = v.reshape(B, N, nhead, hd).transpose(0, 2, 1, 3)
        s = q @ k.transpose(0, 1, 3, 2)
        p = jax.nn.softmax(s, axis=-1)
        a = (p @ v).transpose(0, 2, 1, 3).reshape(B, N, D)
        a = a @ params["wo"][l].astype(jnp.float32) + params["bo"][l]
        y = ln(y + a, params["ln1_w"][l], params["ln1_b"][l])
        h = jnp.maximum(y @ params["w1"][l].astype(jnp.float32) + params["b1"][l], 0.0)
        h = h @ params["w2"][l].astype(jnp.float32) + params["b2"][l]
        y = ln(y + h, params["ln2_w"][l], params["ln2_b"][l])
    return y.astype(x.dtype)


if __name__ == "__main__":
    # small config: B=2, N=8 patches, d_model=32, nhead=4, num_layers=2, dim_feedforward=64
    B, N, D = 2, 8, 32
    nhead, num_layers, dim_ff = 4, 2, 64

    root = jax.random.PRNGKey(0)
    x_key, p_key = jax.random.split(root)
    x = jax.random.normal(x_key, (B, N, D), jnp.float32)
    params = init_encoder_params(p_key, num_layers, D, dim_ff, param_dtype=jnp.float32)

    out = transformer_encoder(x, params, nhead)
    out = jax.block_until_ready(out)
    assert out.shape == (B, N, D), out.shape
    assert bool(jnp.all(jnp.isfinite(out)))

    # Loose tolerance: kernel uses approx reciprocal for the softmax denominator.
    ref = reference_forward(x, params, nhead)
    max_err = float(jnp.max(jnp.abs(out - ref)))
    assert max_err < 5e-2, f"max abs error vs reference: {max_err}"

    print("KERNEL_OK")
</pallas_src>

<mosaic_0001>
module attributes {stable_mosaic.version = 11 : i64} {
  func.func @fused_encoder_kernel(%arg0: i32, %arg1: i32, %arg2: memref<2x8x32xf32, #tpu.memory_space<vmem>>, %arg3: memref<1x32x96xf32, #tpu.memory_space<vmem>>, %arg4: memref<1x1x96xf32, #tpu.memory_space<vmem>>, %arg5: memref<1x32x32xf32, #tpu.memory_space<vmem>>, %arg6: memref<1x1x32xf32, #tpu.memory_space<vmem>>, %arg7: memref<1x1x32xf32, #tpu.memory_space<vmem>>, %arg8: memref<1x1x32xf32, #tpu.memory_space<vmem>>, %arg9: memref<1x1x32xf32, #tpu.memory_space<vmem>>, %arg10: memref<1x1x32xf32, #tpu.memory_space<vmem>>, %arg11: memref<1x32x64xf32, #tpu.memory_space<vmem>>, %arg12: memref<1x1x64xf32, #tpu.memory_space<vmem>>, %arg13: memref<1x64x32xf32, #tpu.memory_space<vmem>>, %arg14: memref<1x1x32xf32, #tpu.memory_space<vmem>>, %arg15: memref<2x8x32xf32, #tpu.memory_space<vmem>>, %arg16: memref<2x8x32xf32, #tpu.memory_space<vmem>>, %arg17: memref<2x8x32xf32, #tpu.memory_space<vmem>>) attributes {dimension_semantics = [#tpu.dimension_semantics<parallel>, #tpu.dimension_semantics<arbitrary>], iteration_bounds = array<i64: 1, 2>, scalar_prefetch = 0 : i64, scratch_operands = 2 : i64, tpu.core_type = #tpu.core_type<tc>, window_params = [{transform_indices = @transform_0, window_bounds = array<i64: 2, 8, 32>}, {transform_indices = @transform_1, window_bounds = array<i64: 1, 32, 96>}, {transform_indices = @transform_2, window_bounds = array<i64: 1, 1, 96>}, {transform_indices = @transform_3, window_bounds = array<i64: 1, 32, 32>}, {transform_indices = @transform_4, window_bounds = array<i64: 1, 1, 32>}, {transform_indices = @transform_5, window_bounds = array<i64: 1, 1, 32>}, {transform_indices = @transform_6, window_bounds = array<i64: 1, 1, 32>}, {transform_indices = @transform_7, window_bounds = array<i64: 1, 1, 32>}, {transform_indices = @transform_8, window_bounds = array<i64: 1, 1, 32>}, {transform_indices = @transform_9, window_bounds = array<i64: 1, 32, 64>}, {transform_indices = @transform_10, window_bounds = array<i64: 1, 1, 64>}, {transform_indices = @transform_11, window_bounds = array<i64: 1, 64, 32>}, {transform_indices = @transform_12, window_bounds = array<i64: 1, 1, 32>}, {transform_indices = @transform_13, window_bounds = array<i64: 2, 8, 32>}]} {
    %c0_i32 = arith.constant 0 : i32
    %0 = arith.cmpi eq, %arg1, %c0_i32 : i32
    %1 = arith.extui %0 : i1 to i32
    %c0_i32_0 = arith.constant 0 : i32
    %2 = arith.cmpi ne, %1, %c0_i32_0 : i32
    scf.if %2 {
      %c0_86 = arith.constant 0 : index
      %c0_87 = arith.constant 0 : index
      %c0_88 = arith.constant 0 : index
      %168 = vector.load %arg2[%c0_86, %c0_87, %c0_88] : memref<2x8x32xf32, #tpu.memory_space<vmem>>, vector<2x8x32xf32>
      %c0_89 = arith.constant 0 : index
      %c0_90 = arith.constant 0 : index
      %c0_91 = arith.constant 0 : index
      %169 = vector.load %arg16[%c0_89, %c0_90, %c0_91] : memref<2x8x32xf32, #tpu.memory_space<vmem>>, vector<2x8x32xf32>
      tpu.vector_store %arg16[%c0_89, %c0_90, %c0_91], %168 {strides = array<i32>} : memref<2x8x32xf32, #tpu.memory_space<vmem>>, vector<2x8x32xf32>,
    } else {
    }
    %c0 = arith.constant 0 : index
    %c0_1 = arith.constant 0 : index
    %c0_2 = arith.constant 0 : index
    %3 = vector.load %arg16[%c0, %c0_1, %c0_2] : memref<2x8x32xf32, #tpu.memory_space<vmem>>, vector<2x8x32xf32>
    %4 = vector.shape_cast %3 : vector<2x8x32xf32> to vector<16x32xf32>
    %c0_3 = arith.constant 0 : index
    %c0_4 = arith.constant 0 : index
    %c0_5 = arith.constant 0 : index
    %5 = vector.load %arg3[%c0_3, %c0_4, %c0_5] : memref<1x32x96xf32, #tpu.memory_space<vmem>>, vector<1x32x96xf32>
    %6 = vector.shape_cast %5 : vector<1x32x96xf32> to vector<32x96xf32>
    %cst = arith.constant dense<0.000000e+00> : vector<16x96xf32>
    %7 = tpu.matmul %4, %6, %cst {dimension_numbers = #tpu.dot_dimension_numbers<[1], [0], [0], [1], [0, 0, 1, 1], [], []>} : vector<16x32xf32>, vector<32x96xf32>, vector<16x96xf32> -> vector<16x96xf32>
    %c0_6 = arith.constant 0 : index
    %c0_7 = arith.constant 0 : index
    %c0_8 = arith.constant 0 : index
    %8 = vector.load %arg4[%c0_6, %c0_7, %c0_8] : memref<1x1x96xf32, #tpu.memory_space<vmem>>, vector<1x1x96xf32>
    %9 = vector.shape_cast %8 : vector<1x1x96xf32> to vector<1x96xf32>
    %10 = vector.broadcast %9 : vector<1x96xf32> to vector<16x96xf32>
    %11 = arith.addf %7, %10 : vector<16x96xf32>
    %12 = vector.extract_strided_slice %11 {offsets = [0, 0], sizes = [16, 32], strides = [1, 1]} : vector<16x96xf32> to vector<16x32xf32>
    %cst_9 = arith.constant 0.353553385 : f32
    %13 = vector.broadcast %cst_9 : f32 to vector<16x32xf32>
    %14 = arith.mulf %12, %13 : vector<16x32xf32>
    %15 = vector.shape_cast %14 : vector<16x32xf32> to vector<2x8x32xf32>
    %16 = vector.extract_strided_slice %11 {offsets = [0, 32], sizes = [16, 32], strides = [1, 1]} : vector<16x96xf32> to vector<16x32xf32>
    %17 = vector.shape_cast %16 : vector<16x32xf32> to vector<2x8x32xf32>
    %18 = vector.extract_strided_slice %11 {offsets = [0, 64], sizes = [16, 32], strides = [1, 1]} : vector<16x96xf32> to vector<16x32xf32>
    %19 = vector.shape_cast %18 : vector<16x32xf32> to vector<2x8x32xf32>
    %20 = vector.extract_strided_slice %15 {offsets = [0, 0, 0], sizes = [2, 8, 8], strides = [1, 1, 1]} : vector<2x8x32xf32> to vector<2x8x8xf32>
    %21 = vector.extract_strided_slice %17 {offsets = [0, 0, 0], sizes = [2, 8, 8], strides = [1, 1, 1]} : vector<2x8x32xf32> to vector<2x8x8xf32>
    %22 = vector.extract_strided_slice %19 {offsets = [0, 0, 0], sizes = [2, 8, 8], strides = [1, 1, 1]} : vector<2x8x32xf32> to vector<2x8x8xf32>
    "tpu.trace_start"() <{level = 10 : i32, message = "bnd,bmd->bnm"}> : () -> ()
    %cst_10 = arith.constant dense<0.000000e+00> : vector<2x8x8xf32>
    %23 = tpu.matmul %20, %21, %cst_10 {dimension_numbers = #tpu.dot_dimension_numbers<[2], [2], [1], [1], [0, 0, 0, 1, 1, 1], [0], [0]>} : vector<2x8x8xf32>, vector<2x8x8xf32>, vector<2x8x8xf32> -> vector<2x8x8xf32>
    "tpu.trace_stop"() : () -> ()
    %cst_11 = arith.constant dense<0xFF800000> : vector<2x8xf32>
    %24 = vector.multi_reduction <maximumf>, %23, %cst_11 [2] : vector<2x8x8xf32> to vector<2x8xf32>
    %25 = vector.shape_cast %24 : vector<2x8xf32> to vector<2x8x1xf32>
    %26 = vector.broadcast %25 : vector<2x8x1xf32> to vector<2x8x8xf32>
    %27 = arith.subf %23, %26 : vector<2x8x8xf32>
    %28 = math.exp %27 : vector<2x8x8xf32>
    %cst_12 = arith.constant dense<0.000000e+00> : vector<2x8xf32>
    %29 = vector.multi_reduction <add>, %28, %cst_12 [2] : vector<2x8x8xf32> to vector<2x8xf32>
    %30 = vector.shape_cast %29 : vector<2x8xf32> to vector<2x8x1xf32>
    %31 = tpu.reciprocal %30 {approx = true} : vector<2x8x1xf32> -> vector<2x8x1xf32>
    %32 = vector.broadcast %31 : vector<2x8x1xf32> to vector<2x8x8xf32>
    %33 = arith.mulf %28, %32 : vector<2x8x8xf32>
    "tpu.trace_start"() <{level = 10 : i32, message = "bnm,bmd->bnd"}> : () -> ()
    %cst_13 = arith.constant dense<0.000000e+00> : vector<2x8x8xf32>
    %34 = tpu.matmul %33, %22, %cst_13 {dimension_numbers = #tpu.dot_dimension_numbers<[2], [1], [1], [2], [0, 0, 0, 1, 1, 2], [0], [0]>} : vector<2x8x8xf32>, vector<2x8x8xf32>, vector<2x8x8xf32> -> vector<2x8x8xf32>
    "tpu.trace_stop"() : () -> ()
    %c0_14 = arith.constant 0 : index
    %c0_15 = arith.constant 0 : index
    %c0_16 = arith.constant 0 : index
    %35 = vector.load %arg17[%c0_14, %c0_15, %c0_16] : memref<2x8x32xf32, #tpu.memory_space<vmem>>, vector<2x8x8xf32>
    tpu.vector_store %arg17[%c0_14, %c0_15, %c0_16], %34 {strides = array<i32>} : memref<2x8x32xf32, #tpu.memory_space<vmem>>, vector<2x8x8xf32>,
    %36 = vector.extract_strided_slice %15 {offsets = [0, 0, 8], sizes = [2, 8, 8], strides = [1, 1, 1]} : vector<2x8x32xf32> to vector<2x8x8xf32>
    %37 = vector.extract_strided_slice %17 {offsets = [0, 0, 8], sizes = [2, 8, 8], strides = [1, 1, 1]} : vector<2x8x32xf32> to vector<2x8x8xf32>
    %38 = vector.extract_strided_slice %19 {offsets = [0, 0, 8], sizes = [2, 8, 8], strides = [1, 1, 1]} : vector<2x8x32xf32> to vector<2x8x8xf32>
    "tpu.trace_start"() <{level = 10 : i32, message = "bnd,bmd->bnm"}> : () -> ()
    %cst_17 = arith.constant dense<0.000000e+00> : vector<2x8x8xf32>
    %39 = tpu.matmul %36, %37, %cst_17 {dimension_numbers = #tpu.dot_dimension_numbers<[2], [2], [1], [1], [0, 0, 0, 1, 1, 1], [0], [0]>} : vector<2x8x8xf32>, vector<2x8x8xf32>, vector<2x8x8xf32> -> vector<2x8x8xf32>
    "tpu.trace_stop"() : () -> ()
    %cst_18 = arith.constant dense<0xFF800000> : vector<2x8xf32>
    %40 = vector.multi_reduction <maximumf>, %39, %cst_18 [2] : vector<2x8x8xf32> to vector<2x8xf32>
    %41 = vector.shape_cast %40 : vector<2x8xf32> to vector<2x8x1xf32>
    %42 = vector.broadcast %41 : vector<2x8x1xf32> to vector<2x8x8xf32>
    %43 = arith.subf %39, %42 : vector<2x8x8xf32>
    %44 = math.exp %43 : vector<2x8x8xf32>
    %cst_19 = arith.constant dense<0.000000e+00> : vector<2x8xf32>
    %45 = vector.multi_reduction <add>, %44, %cst_19 [2] : vector<2x8x8xf32> to vector<2x8xf32>
    %46 = vector.shape_cast %45 : vector<2x8xf32> to vector<2x8x1xf32>
    %47 = tpu.reciprocal %46 {approx = true} : vector<2x8x1xf32> -> vector<2x8x1xf32>
    %48 = vector.broadcast %47 : vector<2x8x1xf32> to vector<2x8x8xf32>
    %49 = arith.mulf %44, %48 : vector<2x8x8xf32>
    "tpu.trace_start"() <{level = 10 : i32, message = "bnm,bmd->bnd"}> : () -> ()
    %cst_20 = arith.constant dense<0.000000e+00> : vector<2x8x8xf32>
    %50 = tpu.matmul %49, %38, %cst_20 {dimension_numbers = #tpu.dot_dimension_numbers<[2], [1], [1], [2], [0, 0, 0, 1, 1, 2], [0], [0]>} : vector<2x8x8xf32>, vector<2x8x8xf32>, vector<2x8x8xf32> -> vector<2x8x8xf32>
    "tpu.trace_stop"() : () -> ()
    %c0_21 = arith.constant 0 : index
    %c0_22 = arith.constant 0 : index
    %c8 = arith.constant 8 : index
    %51 = vector.load %arg17[%c0_21, %c0_22, %c8] : memref<2x8x32xf32, #tpu.memory_space<vmem>>, vector<2x8x8xf32>
    tpu.vector_store %arg17[%c0_21, %c0_22, %c8], %50 {strides = array<i32>} : memref<2x8x32xf32, #tpu.memory_space<vmem>>, vector<2x8x8xf32>,
    %52 = vector.extract_strided_slice %15 {offsets = [0, 0, 16], sizes = [2, 8, 8], strides = [1, 1, 1]} : vector<2x8x32xf32> to vector<2x8x8xf32>
    %53 = vector.extract_strided_slice %17 {offsets = [0, 0, 16], sizes = [2, 8, 8], strides = [1, 1, 1]} : vector<2x8x32xf32> to vector<2x8x8xf32>
    %54 = vector.extract_strided_slice %19 {offsets = [0, 0, 16], sizes = [2, 8, 8], strides = [1, 1, 1]} : vector<2x8x32xf32> to vector<2x8x8xf32>
    "tpu.trace_start"() <{level = 10 : i32, message = "bnd,bmd->bnm"}> : () -> ()
    %cst_23 = arith.constant dense<0.000000e+00> : vector<2x8x8xf32>
    %55 = tpu.matmul %52, %53, %cst_23 {dimension_numbers = #tpu.dot_dimension_numbers<[2], [2], [1], [1], [0, 0, 0, 1, 1, 1], [0], [0]>} : vector<2x8x8xf32>, vector<2x8x8xf32>, vector<2x8x8xf32> -> vector<2x8x8xf32>
    "tpu.trace_stop"() : () -> ()
    %cst_24 = arith.constant dense<0xFF800000> : vector<2x8xf32>
    %56 = vector.multi_reduction <maximumf>, %55, %cst_24 [2] : vector<2x8x8xf32> to vector<2x8xf32>
    %57 = vector.shape_cast %56 : vector<2x8xf32> to vector<2x8x1xf32>
    %58 = vector.broadcast %57 : vector<2x8x1xf32> to vector<2x8x8xf32>
    %59 = arith.subf %55, %58 : vector<2x8x8xf32>
    %60 = math.exp %59 : vector<2x8x8xf32>
    %cst_25 = arith.constant dense<0.000000e+00> : vector<2x8xf32>
    %61 = vector.multi_reduction <add>, %60, %cst_25 [2] : vector<2x8x8xf32> to vector<2x8xf32>
    %62 = vector.shape_cast %61 : vector<2x8xf32> to vector<2x8x1xf32>
    %63 = tpu.reciprocal %62 {approx = true} : vector<2x8x1xf32> -> vector<2x8x1xf32>
    %64 = vector.broadcast %63 : vector<2x8x1xf32> to vector<2x8x8xf32>
    %65 = arith.mulf %60, %64 : vector<2x8x8xf32>
    "tpu.trace_start"() <{level = 10 : i32, message = "bnm,bmd->bnd"}> : () -> ()
    %cst_26 = arith.constant dense<0.000000e+00> : vector<2x8x8xf32>
    %66 = tpu.matmul %65, %54, %cst_26 {dimension_numbers = #tpu.dot_dimension_numbers<[2], [1], [1], [2], [0, 0, 0, 1, 1, 2], [0], [0]>} : vector<2x8x8xf32>, vector<2x8x8xf32>, vector<2x8x8xf32> -> vector<2x8x8xf32>
    "tpu.trace_stop"() : () -> ()
    %c0_27 = arith.constant 0 : index
    %c0_28 = arith.constant 0 : index
    %c16 = arith.constant 16 : index
    %67 = vector.load %arg17[%c0_27, %c0_28, %c16] : memref<2x8x32xf32, #tpu.memory_space<vmem>>, vector<2x8x8xf32>
    tpu.vector_store %arg17[%c0_27, %c0_28, %c16], %66 {strides = array<i32>} : memref<2x8x32xf32, #tpu.memory_space<vmem>>, vector<2x8x8xf32>,
    %68 = vector.extract_strided_slice %15 {offsets = [0, 0, 24], sizes = [2, 8, 8], strides = [1, 1, 1]} : vector<2x8x32xf32> to vector<2x8x8xf32>
    %69 = vector.extract_strided_slice %17 {offsets = [0, 0, 24], sizes = [2, 8, 8], strides = [1, 1, 1]} : vector<2x8x32xf32> to vector<2x8x8xf32>
    %70 = vector.extract_strided_slice %19 {offsets = [0, 0, 24], sizes = [2, 8, 8], strides = [1, 1, 1]} : vector<2x8x32xf32> to vector<2x8x8xf32>
    "tpu.trace_start"() <{level = 10 : i32, message = "bnd,bmd->bnm"}> : () -> ()
    %cst_29 = arith.constant dense<0.000000e+00> : vector<2x8x8xf32>
    %71 = tpu.matmul %68, %69, %cst_29 {dimension_numbers = #tpu.dot_dimension_numbers<[2], [2], [1], [1], [0, 0, 0, 1, 1, 1], [0], [0]>} : vector<2x8x8xf32>, vector<2x8x8xf32>, vector<2x8x8xf32> -> vector<2x8x8xf32>
    "tpu.trace_stop"() : () -> ()
    %cst_30 = arith.constant dense<0xFF800000> : vector<2x8xf32>
    %72 = vector.multi_reduction <maximumf>, %71, %cst_30 [2] : vector<2x8x8xf32> to vector<2x8xf32>
    %73 = vector.shape_cast %72 : vector<2x8xf32> to vector<2x8x1xf32>
    %74 = vector.broadcast %73 : vector<2x8x1xf32> to vector<2x8x8xf32>
    %75 = arith.subf %71, %74 : vector<2x8x8xf32>
    %76 = math.exp %75 : vector<2x8x8xf32>
    %cst_31 = arith.constant dense<0.000000e+00> : vector<2x8xf32>
    %77 = vector.multi_reduction <add>, %76, %cst_31 [2] : vector<2x8x8xf32> to vector<2x8xf32>
    %78 = vector.shape_cast %77 : vector<2x8xf32> to vector<2x8x1xf32>
    %79 = tpu.reciprocal %78 {approx = true} : vector<2x8x1xf32> -> vector<2x8x1xf32>
    %80 = vector.broadcast %79 : vector<2x8x1xf32> to vector<2x8x8xf32>
    %81 = arith.mulf %76, %80 : vector<2x8x8xf32>
    "tpu.trace_start"() <{level = 10 : i32, message = "bnm,bmd->bnd"}> : () -> ()
    %cst_32 = arith.constant dense<0.000000e+00> : vector<2x8x8xf32>
    %82 = tpu.matmul %81, %70, %cst_32 {dimension_numbers = #tpu.dot_dimension_numbers<[2], [1], [1], [2], [0, 0, 0, 1, 1, 2], [0], [0]>} : vector<2x8x8xf32>, vector<2x8x8xf32>, vector<2x8x8xf32> -> vector<2x8x8xf32>
    "tpu.trace_stop"() : () -> ()
    %c0_33 = arith.constant 0 : index
    %c0_34 = arith.constant 0 : index
    %c24 = arith.constant 24 : index
    %83 = vector.load %arg17[%c0_33, %c0_34, %c24] : memref<2x8x32xf32, #tpu.memory_space<vmem>>, vector<2x8x8xf32>
    tpu.vector_store %arg17[%c0_33, %c0_34, %c24], %82 {strides = array<i32>} : memref<2x8x32xf32, #tpu.memory_space<vmem>>, vector<2x8x8xf32>,
    %c0_35 = arith.constant 0 : index
    %c0_36 = arith.constant 0 : index
    %c0_37 = arith.constant 0 : index
    %84 = vector.load %arg17[%c0_35, %c0_36, %c0_37] : memref<2x8x32xf32, #tpu.memory_space<vmem>>, vector<2x8x32xf32>
    %85 = vector.shape_cast %84 : vector<2x8x32xf32> to vector<16x32xf32>
    %c0_38 = arith.constant 0 : index
    %c0_39 = arith.constant 0 : index
    %c0_40 = arith.constant 0 : index
    %86 = vector.load %arg5[%c0_38, %c0_39, %c0_40] : memref<1x32x32xf32, #tpu.memory_space<vmem>>, vector<1x32x32xf32>
    %87 = vector.shape_cast %86 : vector<1x32x32xf32> to vector<32x32xf32>
    %cst_41 = arith.constant dense<0.000000e+00> : vector<16x32xf32>
    %88 = tpu.matmul %85, %87, %cst_41 {dimension_numbers = #tpu.dot_dimension_numbers<[1], [0], [0], [1], [0, 0, 1, 1], [], []>} : vector<16x32xf32>, vector<32x32xf32>, vector<16x32xf32> -> vector<16x32xf32>
    %c0_42 = arith.constant 0 : index
    %c0_43 = arith.constant 0 : index
    %c0_44 = arith.constant 0 : index
    %89 = vector.load %arg6[%c0_42, %c0_43, %c0_44] : memref<1x1x32xf32, #tpu.memory_space<vmem>>, vector<1x1x32xf32>
    %90 = vector.shape_cast %89 : vector<1x1x32xf32> to vector<1x32xf32>
    %91 = vector.broadcast %90 : vector<1x32xf32> to vector<16x32xf32>
    %92 = arith.addf %88, %91 : vector<16x32xf32>
    %93 = arith.addf %4, %92 : vector<16x32xf32>
    %c0_45 = arith.constant 0 : index
    %c0_46 = arith.constant 0 : index
    %c0_47 = arith.constant 0 : index
    %94 = vector.load %arg7[%c0_45, %c0_46, %c0_47] : memref<1x1x32xf32, #tpu.memory_space<vmem>>, vector<1x1x32xf32>
    %95 = vector.shape_cast %94 : vector<1x1x32xf32> to vector<1x32xf32>
    %c0_48 = arith.constant 0 : index
    %c0_49 = arith.constant 0 : index
    %c0_50 = arith.constant 0 : index
    %96 = vector.load %arg8[%c0_48, %c0_49, %c0_50] : memref<1x1x32xf32, #tpu.memory_space<vmem>>, vector<1x1x32xf32>
    %97 = vector.shape_cast %96 : vector<1x1x32xf32> to vector<1x32xf32>
    %cst_51 = arith.constant dense<0.000000e+00> : vector<16xf32>
    %98 = vector.multi_reduction <add>, %93, %cst_51 [1] : vector<16x32xf32> to vector<16xf32>
    %99 = vector.shape_cast %98 : vector<16xf32> to vector<16x1xf32>
    %cst_52 = arith.constant 3.200000e+01 : f32
    %100 = vector.broadcast %cst_52 : f32 to vector<16x1xf32>
    %101 = arith.divf %99, %100 : vector<16x1xf32>
    %102 = vector.broadcast %101 : vector<16x1xf32> to vector<16x32xf32>
    %103 = arith.subf %93, %102 : vector<16x32xf32>
    %104 = arith.mulf %103, %103 : vector<16x32xf32>
    %cst_53 = arith.constant dense<0.000000e+00> : vector<16xf32>
    %105 = vector.multi_reduction <add>, %104, %cst_53 [1] : vector<16x32xf32> to vector<16xf32>
    %106 = vector.shape_cast %105 : vector<16xf32> to vector<16x1xf32>
    %cst_54 = arith.constant 3.200000e+01 : f32
    %107 = vector.broadcast %cst_54 : f32 to vector<16x1xf32>
    %108 = arith.divf %106, %107 : vector<16x1xf32>
    %109 = vector.broadcast %101 : vector<16x1xf32> to vector<16x32xf32>
    %110 = arith.subf %93, %109 : vector<16x32xf32>
    %cst_55 = arith.constant 9.99999974E-6 : f32
    %111 = vector.broadcast %cst_55 : f32 to vector<16x1xf32>
    %112 = arith.addf %108, %111 : vector<16x1xf32>
    %113 = math.rsqrt %112 : vector<16x1xf32>
    %114 = vector.broadcast %113 : vector<16x1xf32> to vector<16x32xf32>
    %115 = arith.mulf %110, %114 : vector<16x32xf32>
    %116 = vector.broadcast %95 : vector<1x32xf32> to vector<16x32xf32>
    %117 = arith.mulf %115, %116 : vector<16x32xf32>
    %118 = vector.broadcast %97 : vector<1x32xf32> to vector<16x32xf32>
    %119 = arith.addf %117, %118 : vector<16x32xf32>
    %c0_56 = arith.constant 0 : index
    %c0_57 = arith.constant 0 : index
    %c0_58 = arith.constant 0 : index
    %120 = vector.load %arg11[%c0_56, %c0_57, %c0_58] : memref<1x32x64xf32, #tpu.memory_space<vmem>>, vector<1x32x64xf32>
    %121 = vector.shape_cast %120 : vector<1x32x64xf32> to vector<32x64xf32>
    %cst_59 = arith.constant dense<0.000000e+00> : vector<16x64xf32>
    %122 = tpu.matmul %119, %121, %cst_59 {dimension_numbers = #tpu.dot_dimension_numbers<[1], [0], [0], [1], [0, 0, 1, 1], [], []>} : vector<16x32xf32>, vector<32x64xf32>, vector<16x64xf32> -> vector<16x64xf32>
    %c0_60 = arith.constant 0 : index
    %c0_61 = arith.constant 0 : index
    %c0_62 = arith.constant 0 : index
    %123 = vector.load %arg12[%c0_60, %c0_61, %c0_62] : memref<1x1x64xf32, #tpu.memory_space<vmem>>, vector<1x1x64xf32>
    %124 = vector.shape_cast %123 : vector<1x1x64xf32> to vector<1x64xf32>
    %125 = vector.broadcast %124 : vector<1x64xf32> to vector<16x64xf32>
    %126 = arith.addf %122, %125 : vector<16x64xf32>
    %cst_63 = arith.constant 0.000000e+00 : f32
    %127 = vector.broadcast %cst_63 : f32 to vector<16x64xf32>
    %128 = arith.maximumf %126, %127 : vector<16x64xf32>
    %c0_64 = arith.constant 0 : index
    %c0_65 = arith.constant 0 : index
    %c0_66 = arith.constant 0 : index
    %129 = vector.load %arg13[%c0_64, %c0_65, %c0_66] : memref<1x64x32xf32, #tpu.memory_space<vmem>>, vector<1x64x32xf32>
    %130 = vector.shape_cast %129 : vector<1x64x32xf32> to vector<64x32xf32>
    %cst_67 = arith.constant dense<0.000000e+00> : vector<16x32xf32>
    %131 = tpu.matmul %128, %130, %cst_67 {dimension_numbers = #tpu.dot_dimension_numbers<[1], [0], [0], [1], [0, 0, 1, 1], [], []>} : vector<16x64xf32>, vector<64x32xf32>, vector<16x32xf32> -> vector<16x32xf32>
    %c0_68 = arith.constant 0 : index
    %c0_69 = arith.constant 0 : index
    %c0_70 = arith.constant 0 : index
    %132 = vector.load %arg14[%c0_68, %c0_69, %c0_70] : memref<1x1x32xf32, #tpu.memory_space<vmem>>, vector<1x1x32xf32>
    %133 = vector.shape_cast %132 : vector<1x1x32xf32> to vector<1x32xf32>
    %134 = vector.broadcast %133 : vector<1x32xf32> to vector<16x32xf32>
    %135 = arith.addf %131, %134 : vector<16x32xf32>
    %136 = arith.addf %119, %135 : vector<16x32xf32>
    %c0_71 = arith.constant 0 : index
    %c0_72 = arith.constant 0 : index
    %c0_73 = arith.constant 0 : index
    %137 = vector.load %arg9[%c0_71, %c0_72, %c0_73] : memref<1x1x32xf32, #tpu.memory_space<vmem>>, vector<1x1x32xf32>
    %138 = vector.shape_cast %137 : vector<1x1x32xf32> to vector<1x32xf32>
    %c0_74 = arith.constant 0 : index
    %c0_75 = arith.constant 0 : index
    %c0_76 = arith.constant 0 : index
    %139 = vector.load %arg10[%c0_74, %c0_75, %c0_76] : memref<1x1x32xf32, #tpu.memory_space<vmem>>, vector<1x1x32xf32>
    %140 = vector.shape_cast %139 : vector<1x1x32xf32> to vector<1x32xf32>
    %cst_77 = arith.constant dense<0.000000e+00> : vector<16xf32>
    %141 = vector.multi_reduction <add>, %136, %cst_77 [1] : vector<16x32xf32> to vector<16xf32>
    %142 = vector.shape_cast %141 : vector<16xf32> to vector<16x1xf32>
    %cst_78 = arith.constant 3.200000e+01 : f32
    %143 = vector.broadcast %cst_78 : f32 to vector<16x1xf32>
    %144 = arith.divf %142, %143 : vector<16x1xf32>
    %145 = vector.broadcast %144 : vector<16x1xf32> to vector<16x32xf32>
    %146 = arith.subf %136, %145 : vector<16x32xf32>
    %147 = arith.mulf %146, %146 : vector<16x32xf32>
    %cst_79 = arith.constant dense<0.000000e+00> : vector<16xf32>
    %148 = vector.multi_reduction <add>, %147, %cst_79 [1] : vector<16x32xf32> to vector<16xf32>
    %149 = vector.shape_cast %148 : vector<16xf32> to vector<16x1xf32>
    %cst_80 = arith.constant 3.200000e+01 : f32
    %150 = vector.broadcast %cst_80 : f32 to vector<16x1xf32>
    %151 = arith.divf %149, %150 : vector<16x1xf32>
    %152 = vector.broadcast %144 : vector<16x1xf32> to vector<16x32xf32>
    %153 = arith.subf %136, %152 : vector<16x32xf32>
    %cst_81 = arith.constant 9.99999974E-6 : f32
    %154 = vector.broadcast %cst_81 : f32 to vector<16x1xf32>
    %155 = arith.addf %151, %154 : vector<16x1xf32>
    %156 = math.rsqrt %155 : vector<16x1xf32>
    %157 = vector.broadcast %156 : vector<16x1xf32> to vector<16x32xf32>
    %158 = arith.mulf %153, %157 : vector<16x32xf32>
    %159 = vector.broadcast %138 : vector<1x32xf32> to vector<16x32xf32>
    %160 = arith.mulf %158, %159 : vector<16x32xf32>
    %161 = vector.broadcast %140 : vector<1x32xf32> to vector<16x32xf32>
    %162 = arith.addf %160, %161 : vector<16x32xf32>
    %163 = vector.shape_cast %162 : vector<16x32xf32> to vector<2x8x32xf32>
    %c0_82 = arith.constant 0 : index
    %c0_83 = arith.constant 0 : index
    %c0_84 = arith.constant 0 : index
    %164 = vector.load %arg16[%c0_82, %c0_83, %c0_84] : memref<2x8x32xf32, #tpu.memory_space<vmem>>, vector<2x8x32xf32>
    tpu.vector_store %arg16[%c0_82, %c0_83, %c0_84], %163 {strides = array<i32>} : memref<2x8x32xf32, #tpu.memory_space<vmem>>, vector<2x8x32xf32>,
    %c1_i32 = arith.constant 1 : i32
    %165 = arith.cmpi eq, %arg1, %c1_i32 : i32
    %166 = arith.extui %165 : i1 to i32
    %c0_i32_85 = arith.constant 0 : i32
    %167 = arith.cmpi ne, %166, %c0_i32_85 : i32
    scf.if %167 {
      %c0_86 = arith.constant 0 : index
      %c0_87 = arith.constant 0 : index
      %c0_88 = arith.constant 0 : index
      %168 = vector.load %arg16[%c0_86, %c0_87, %c0_88] : memref<2x8x32xf32, #tpu.memory_space<vmem>>, vector<2x8x32xf32>
      %c0_89 = arith.constant 0 : index
      %c0_90 = arith.constant 0 : index
      %c0_91 = arith.constant 0 : index
      %169 = vector.load %arg15[%c0_89, %c0_90, %c0_91] : memref<2x8x32xf32, #tpu.memory_space<vmem>>, vector<2x8x32xf32>
      tpu.vector_store %arg15[%c0_89, %c0_90, %c0_91], %168 {strides = array<i32>} : memref<2x8x32xf32, #tpu.memory_space<vmem>>, vector<2x8x32xf32>,
    } else {
    }
    return
  }
  func.func @transform_0(%arg0: i32, %arg1: i32) -> (i32, i32, i32) {
    %c0_i32 = arith.constant 0 : i32
    %c0_i32_0 = arith.constant 0 : i32
    %c0_i32_1 = arith.constant 0 : i32
    return %arg0, %c0_i32, %c0_i32_0 : i32, i32, i32
  }
  func.func @transform_1(%arg0: i32, %arg1: i32) -> (i32, i32, i32) {
    %c0_i32 = arith.constant 0 : i32
    %c0_i32_0 = arith.constant 0 : i32
    %c0_i32_1 = arith.constant 0 : i32
    return %arg1, %c0_i32, %c0_i32_0 : i32, i32, i32
  }
  func.func @transform_2(%arg0: i32, %arg1: i32) -> (i32, i32, i32) {
    %c0_i32 = arith.constant 0 : i32
    %c0_i32_0 = arith.constant 0 : i32
    %c0_i32_1 = arith.constant 0 : i32
    return %arg1, %c0_i32, %c0_i32_0 : i32, i32, i32
  }
  func.func @transform_3(%arg0: i32, %arg1: i32) -> (i32, i32, i32) {
    %c0_i32 = arith.constant 0 : i32
    %c0_i32_0 = arith.constant 0 : i32
    %c0_i32_1 = arith.constant 0 : i32
    return %arg1, %c0_i32, %c0_i32_0 : i32, i32, i32
  }
  func.func @transform_4(%arg0: i32, %arg1: i32) -> (i32, i32, i32) {
    %c0_i32 = arith.constant 0 : i32
    %c0_i32_0 = arith.constant 0 : i32
    %c0_i32_1 = arith.constant 0 : i32
    return %arg1, %c0_i32, %c0_i32_0 : i32, i32, i32
  }
  func.func @transform_5(%arg0: i32, %arg1: i32) -> (i32, i32, i32) {
    %c0_i32 = arith.constant 0 : i32
    %c0_i32_0 = arith.constant 0 : i32
    %c0_i32_1 = arith.constant 0 : i32
    return %arg1, %c0_i32, %c0_i32_0 : i32, i32, i32
  }
  func.func @transform_6(%arg0: i32, %arg1: i32) -> (i32, i32, i32) {
    %c0_i32 = arith.constant 0 : i32
    %c0_i32_0 = arith.constant 0 : i32
    %c0_i32_1 = arith.constant 0 : i32
    return %arg1, %c0_i32, %c0_i32_0 : i32, i32, i32
  }
  func.func @transform_7(%arg0: i32, %arg1: i32) -> (i32, i32, i32) {
    %c0_i32 = arith.constant 0 : i32
    %c0_i32_0 = arith.constant 0 : i32
    %c0_i32_1 = arith.constant 0 : i32
    return %arg1, %c0_i32, %c0_i32_0 : i32, i32, i32
  }
  func.func @transform_8(%arg0: i32, %arg1: i32) -> (i32, i32, i32) {
    %c0_i32 = arith.constant 0 : i32
    %c0_i32_0 = arith.constant 0 : i32
    %c0_i32_1 = arith.constant 0 : i32
    return %arg1, %c0_i32, %c0_i32_0 : i32, i32, i32
  }
  func.func @transform_9(%arg0: i32, %arg1: i32) -> (i32, i32, i32) {
    %c0_i32 = arith.constant 0 : i32
    %c0_i32_0 = arith.constant 0 : i32
    %c0_i32_1 = arith.constant 0 : i32
    return %arg1, %c0_i32, %c0_i32_0 : i32, i32, i32
  }
  func.func @transform_10(%arg0: i32, %arg1: i32) -> (i32, i32, i32) {
    %c0_i32 = arith.constant 0 : i32
    %c0_i32_0 = arith.constant 0 : i32
    %c0_i32_1 = arith.constant 0 : i32
    return %arg1, %c0_i32, %c0_i32_0 : i32, i32, i32
  }
  func.func @transform_11(%arg0: i32, %arg1: i32) -> (i32, i32, i32) {
    %c0_i32 = arith.constant 0 : i32
    %c0_i32_0 = arith.constant 0 : i32
    %c0_i32_1 = arith.constant 0 : i32
    return %arg1, %c0_i32, %c0_i32_0 : i32, i32, i32
  }
  func.func @transform_12(%arg0: i32, %arg1: i32) -> (i32, i32, i32) {
    %c0_i32 = arith.constant 0 : i32
    %c0_i32_0 = arith.constant 0 : i32
    %c0_i32_1 = arith.constant 0 : i32
    return %arg1, %c0_i32, %c0_i32_0 : i32, i32, i32
  }
  func.func @transform_13(%arg0: i32, %arg1: i32) -> (i32, i32, i32) {
    %c0_i32 = arith.constant 0 : i32
    %c0_i32_0 = arith.constant 0 : i32
    %c0_i32_1 = arith.constant 0 : i32
    return %arg0, %c0_i32, %c0_i32_0 : i32, i32, i32
  }
}

</mosaic_0001>

<llo_original>
// kernel: tpu_custom_call.1
$region0: #{tpu_custom_call.1}
  #allocation0 [shape = 'u32[]', space=smem, size = 0x4, offset = 0x4, fixed_abs, tag = 'smem constant byte address 0x4 - core index']
  #allocation1 [shape = 'u32[144,128]{1,0:T(1,128)}', space=vmem, size = 0x12000, scoped, tag = 'internal scratch']
  #allocation2 [shape = 'f32[2,8,32]{2,1,0:T(8,128)}', space=vmem, size = 0x2000, scoped, tag = 'scratch operand']
  #allocation3 [shape = 'f32[2,8,32]{2,1,0:T(8,128)}', space=vmem, size = 0x2000, scoped, tag = 'scratch operand']
  %s0 = inlined_call_operand.hbm [shape: f32[2,8,32], index: 0, kind: input, shape index: {}]
  %s1 = inlined_call_operand.vmem [shape: f32[2,32,96], index: 1, kind: input, shape index: {}]
  %s2 = inlined_call_operand.vmem [shape: f32[2,1,96], index: 2, kind: input, shape index: {}]
  %s3 = inlined_call_operand.vmem [shape: f32[2,32,32], index: 3, kind: input, shape index: {}]
  %s4 = inlined_call_operand.vmem [shape: f32[2,1,32], index: 4, kind: input, shape index: {}]
  %s5 = inlined_call_operand.vmem [shape: f32[2,1,32], index: 5, kind: input, shape index: {}]
  %s6 = inlined_call_operand.vmem [shape: f32[2,1,32], index: 6, kind: input, shape index: {}]
  %s7 = inlined_call_operand.vmem [shape: f32[2,1,32], index: 7, kind: input, shape index: {}]
  %s8 = inlined_call_operand.vmem [shape: f32[2,1,32], index: 8, kind: input, shape index: {}]
  %s9 = inlined_call_operand.vmem [shape: f32[2,32,64], index: 9, kind: input, shape index: {}]
  %s10 = inlined_call_operand.vmem [shape: f32[2,1,64], index: 10, kind: input, shape index: {}]
  %s11 = inlined_call_operand.vmem [shape: f32[2,64,32], index: 11, kind: input, shape index: {}]
  %s12 = inlined_call_operand.vmem [shape: f32[2,1,32], index: 12, kind: input, shape index: {}]
  %s13 = inlined_call_operand.hbm [shape: f32[2,8,32], index: 13, kind: output, shape index: {}]
  %s14 = sld [smem:[#allocation0]]
  $region97: #{tpu_custom_call.1} parent=0
    _
  %s16 = ssub.s32 1, %s14
  %s17 = scalar_select 0, %s16, %s14
  $region1: #{tpu_custom_call.1} parent=0
    #allocation4 [shape = 'u8[8192]{0}', space=vmem, size = 0x2000, scoped, tag = 'input window, operand 0, single buffered']
    #allocation5 [shape = 's32[2]{0}', space=sflag, size = 0x8, scoped, tag = 'scoped memory for tpu_custom_call.1']
    #allocation6 [shape = 's32[2]{0}', space=sflag, size = 0x8, scoped, tag = 'scoped memory for tpu_custom_call.1']
    #allocation7 [shape = 'u8[8192]{0}', space=vmem, size = 0x2000, scoped, tag = 'output window, operand 0, single buffered']
    %18 = vsyncpa [#allocation5], 0
    %19 = vsyncpa [#allocation6], 0
    loop: start=0, step=1, limit=4
    $region2: #{tpu_custom_call.1} parent=1 // loop_pre_header
      _
    $region3: #{tpu_custom_call.1} parent=1 // loop_header
      %s21 = sphi 0, %s25
      %p22 = scmp.ge.s32.totalorder %s21, 4
      %s28 = sphi 0, %s40
      %s29 = sphi 0, %s36
      %s30 = sphi 0, %s28
      %s31 = sphi 0, %s29
      %s32 = sphi 0, %s30
      %s33 = sphi 0, %s31
      %s43 = sphi 0, %s45
      %s46 = sphi 0, %s43
      %s47 = sphi 0, %s46
      %s63 = sphi 0, %s47
      %s69 = sphi 0, %s71
      %s72 = sphi 0, %s69
      %s73 = sphi 0, %s72
      %s89 = sphi 0, %s73
      %s95 = sphi 0, %s97
      %s98 = sphi 0, %s95
      %s99 = sphi 0, %s98
      %s115 = sphi 0, %s99
      %s121 = sphi 0, %s123
      %s124 = sphi 0, %s121
      %s125 = sphi 0, %s124
      %s141 = sphi 0, %s125
      %s147 = sphi 0, %s149
      %s150 = sphi 0, %s147
      %s151 = sphi 0, %s150
      %s167 = sphi 0, %s151
      %s173 = sphi 0, %s175
      %s176 = sphi 0, %s173
      %s177 = sphi 0, %s176
      %s193 = sphi 0, %s177
      %s199 = sphi 0, %s201
      %s202 = sphi 0, %s199
      %s203 = sphi 0, %s202
      %s219 = sphi 0, %s203
      %s225 = sphi 0, %s227
      %s228 = sphi 0, %s225
      %s229 = sphi 0, %s228
      %s245 = sphi 0, %s229
      %s251 = sphi 0, %s253
      %s254 = sphi 0, %s251
      %s255 = sphi 0, %s254
      %s271 = sphi 0, %s255
      %s277 = sphi 0, %s279
      %s280 = sphi 0, %s277
      %s281 = sphi 0, %s280
      %s297 = sphi 0, %s281
      %s303 = sphi 0, %s305
      %s306 = sphi 0, %s303
      %s307 = sphi 0, %s306
      %s323 = sphi 0, %s307
      %s329 = sphi 0, %s331
      %s332 = sphi 0, %s329
      %s333 = sphi 0, %s332
      %s349 = sphi 0, %s333
      %s355 = sphi 0, %s357
      %s358 = sphi 0, %s355
      %s359 = sphi 0, %s358
      %s375 = sphi 0, %s359
      %s381 = sphi 0, %s383
      %s384 = sphi 0, %s381
      %s385 = sphi 0, %s384
      %s401 = sphi 0, %s385
    $region4: #{tpu_custom_call.1} parent=1 // loop_header_branch
      %24 = sbr.rel (%p22) target = $region8
    $region5: #{tpu_custom_call.1} parent=1 // loop_body
      %s26 = ssub.s32 %s21, 1
      %s27 = ssub.s32 %s21, 2
      %s34 = sadd.s32 1, %s29
      %p35 = scmp.ge.s32.totalorder %s34, 2
      %s36 = scalar_select %p35, 0, %s34
      %s37 = sadd.s32 1, %s28
      %s38 = scalar_select %p35, %s37, %s28
      %p39 = scmp.ge.s32.totalorder %s38, 1
      %s40 = scalar_select %p39, 0, %s38
      %s41 = ssub.s32 %s28, %s40
      %p42 = scmp.eq.s32.totalorder %s41, 0
      %s44 = sadd.s32 %s43, 1
      %s45 = scalar_select %p42, %s43, %s44
      %p48 = pneg %p42
      %p49 = scmp.eq.s32.totalorder %s21, 1
      %p50 = por %p48, %p49
      %p51 = scmp.ne.s32.totalorder %s43, %s46
      %p52 = scmp.eq.s32.totalorder %s21, 0
      %p53 = por %p51, %p52
      %p54 = scmp.ne.s32.totalorder %s43, %s46
      %p55 = scmp.eq.s32.totalorder %s26, 1
      %p56 = por %p54, %p55
      %p57 = scmp.ne.s32.totalorder %s46, %s47
      %p58 = scmp.eq.s32.totalorder %s26, 0
      %p59 = por %p57, %p58
      %p60 = scmp.ne.s32.totalorder %s46, %s47
      %p61 = scmp.eq.s32.totalorder %s27, 1
      %p62 = por %p60, %p61
      %p64 = scmp.ne.s32.totalorder %s47, %s63
      %p65 = scmp.eq.s32.totalorder %s27, 0
      %p66 = por %p64, %p65
      %s67 = ssub.s32 %s29, %s36
      %p68 = scmp.eq.s32.totalorder %s67, 0
      %s70 = sadd.s32 %s69, 1
      %s71 = scalar_select %p68, %s69, %s70
      %p74 = pneg %p68
      %p75 = scmp.eq.s32.totalorder %s21, 1
      %p76 = por %p74, %p75
      %p77 = scmp.ne.s32.totalorder %s69, %s72
      %p78 = scmp.eq.s32.totalorder %s21, 0
      %p79 = por %p77, %p78
      %p80 = scmp.ne.s32.totalorder %s69, %s72
      %p81 = scmp.eq.s32.totalorder %s26, 1
      %p82 = por %p80, %p81
      %p83 = scmp.ne.s32.totalorder %s72, %s73
      %p84 = scmp.eq.s32.totalorder %s26, 0
      %p85 = por %p83, %p84
      %p86 = scmp.ne.s32.totalorder %s72, %s73
      %p87 = scmp.eq.s32.totalorder %s27, 1
      %p88 = por %p86, %p87
      %p90 = scmp.ne.s32.totalorder %s73, %s89
      %p91 = scmp.eq.s32.totalorder %s27, 0
      %p92 = por %p90, %p91
      %s93 = ssub.s32 %s29, %s36
      %p94 = scmp.eq.s32.totalorder %s93, 0
      %s96 = sadd.s32 %s95, 1
      %s97 = scalar_select %p94, %s95, %s96
      %p100 = pneg %p94
      %p101 = scmp.eq.s32.totalorder %s21, 1
      %p102 = por %p100, %p101
      %p103 = scmp.ne.s32.totalorder %s95, %s98
      %p104 = scmp.eq.s32.totalorder %s21, 0
      %p105 = por %p103, %p104
      %p106 = scmp.ne.s32.totalorder %s95, %s98
      %p107 = scmp.eq.s32.totalorder %s26, 1
      %p108 = por %p106, %p107
      %p109 = scmp.ne.s32.totalorder %s98, %s99
      %p110 = scmp.eq.s32.totalorder %s26, 0
      %p111 = por %p109, %p110
      %p112 = scmp.ne.s32.totalorder %s98, %s99
      %p113 = scmp.eq.s32.totalorder %s27, 1
      %p114 = por %p112, %p113
      %p116 = scmp.ne.s32.totalorder %s99, %s115
      %p117 = scmp.eq.s32.totalorder %s27, 0
      %p118 = por %p116, %p117
      %s119 = ssub.s32 %s29, %s36
      %p120 = scmp.eq.s32.totalorder %s119, 0
      %s122 = sadd.s32 %s121, 1
      %s123 = scalar_select %p120, %s121, %s122
      %p126 = pneg %p120
      %p127 = scmp.eq.s32.totalorder %s21, 1
      %p128 = por %p126, %p127
      %p129 = scmp.ne.s32.totalorder %s121, %s124
      %p130 = scmp.eq.s32.totalorder %s21, 0
      %p131 = por %p129, %p130
      %p132 = scmp.ne.s32.totalorder %s121, %s124
      %p133 = scmp.eq.s32.totalorder %s26, 1
      %p134 = por %p132, %p133
      %p135 = scmp.ne.s32.totalorder %s124, %s125
      %p136 = scmp.eq.s32.totalorder %s26, 0
      %p137 = por %p135, %p136
      %p138 = scmp.ne.s32.totalorder %s124, %s125
      %p139 = scmp.eq.s32.totalorder %s27, 1
      %p140 = por %p138, %p139
      %p142 = scmp.ne.s32.totalorder %s125, %s141
      %p143 = scmp.eq.s32.totalorder %s27, 0
      %p144 = por %p142, %p143
      %s145 = ssub.s32 %s29, %s36
      %p146 = scmp.eq.s32.totalorder %s145, 0
      %s148 = sadd.s32 %s147, 1
      %s149 = scalar_select %p146, %s147, %s148
      %p152 = pneg %p146
      %p153 = scmp.eq.s32.totalorder %s21, 1
      %p154 = por %p152, %p153
      %p155 = scmp.ne.s32.totalorder %s147, %s150
      %p156 = scmp.eq.s32.totalorder %s21, 0
      %p157 = por %p155, %p156
      %p158 = scmp.ne.s32.totalorder %s147, %s150
      %p159 = scmp.eq.s32.totalorder %s26, 1
      %p160 = por %p158, %p159
      %p161 = scmp.ne.s32.totalorder %s150, %s151
      %p162 = scmp.eq.s32.totalorder %s26, 0
      %p163 = por %p161, %p162
      %p164 = scmp.ne.s32.totalorder %s150, %s151
      %p165 = scmp.eq.s32.totalorder %s27, 1
      %p166 = por %p164, %p165
      %p168 = scmp.ne.s32.totalorder %s151, %s167
      %p169 = scmp.eq.s32.totalorder %s27, 0
      %p170 = por %p168, %p169
      %s171 = ssub.s32 %s29, %s36
      %p172 = scmp.eq.s32.totalorder %s171, 0
      %s174 = sadd.s32 %s173, 1
      %s175 = scalar_select %p172, %s173, %s174
      %p178 = pneg %p172
      %p179 = scmp.eq.s32.totalorder %s21, 1
      %p180 = por %p178, %p179
      %p181 = scmp.ne.s32.totalorder %s173, %s176
      %p182 = scmp.eq.s32.totalorder %s21, 0
      %p183 = por %p181, %p182
      %p184 = scmp.ne.s32.totalorder %s173, %s176
      %p185 = scmp.eq.s32.totalorder %s26, 1
      %p186 = por %p184, %p185
      %p187 = scmp.ne.s32.totalorder %s176, %s177
      %p188 = scmp.eq.s32.totalorder %s26, 0
      %p189 = por %p187, %p188
      %p190 = scmp.ne.s32.totalorder %s176, %s177
      %p191 = scmp.eq.s32.totalorder %s27, 1
      %p192 = por %p190, %p191
      %p194 = scmp.ne.s32.totalorder %s177, %s193
      %p195 = scmp.eq.s32.totalorder %s27, 0
      %p196 = por %p194, %p195
      %s197 = ssub.s32 %s29, %s36
      %p198 = scmp.eq.s32.totalorder %s197, 0
      %s200 = sadd.s32 %s199, 1
      %s201 = scalar_select %p198, %s199, %s200
      %p204 = pneg %p198
      %p205 = scmp.eq.s32.totalorder %s21, 1
      %p206 = por %p204, %p205
      %p207 = scmp.ne.s32.totalorder %s199, %s202
      %p208 = scmp.eq.s32.totalorder %s21, 0
      %p209 = por %p207, %p208
      %p210 = scmp.ne.s32.totalorder %s199, %s202
      %p211 = scmp.eq.s32.totalorder %s26, 1
      %p212 = por %p210, %p211
      %p213 = scmp.ne.s32.totalorder %s202, %s203
      %p214 = scmp.eq.s32.totalorder %s26, 0
      %p215 = por %p213, %p214
      %p216 = scmp.ne.s32.totalorder %s202, %s203
      %p217 = scmp.eq.s32.totalorder %s27, 1
      %p218 = por %p216, %p217
      %p220 = scmp.ne.s32.totalorder %s203, %s219
      %p221 = scmp.eq.s32.totalorder %s27, 0
      %p222 = por %p220, %p221
      %s223 = ssub.s32 %s29, %s36
      %p224 = scmp.eq.s32.totalorder %s223, 0
      %s226 = sadd.s32 %s225, 1
      %s227 = scalar_select %p224, %s225, %s226
      %p230 = pneg %p224
      %p231 = scmp.eq.s32.totalorder %s21, 1
      %p232 = por %p230, %p231
      %p233 = scmp.ne.s32.totalorder %s225, %s228
      %p234 = scmp.eq.s32.totalorder %s21, 0
      %p235 = por %p233, %p234
      %p236 = scmp.ne.s32.totalorder %s225, %s228
      %p237 = scmp.eq.s32.totalorder %s26, 1
      %p238 = por %p236, %p237
      %p239 = scmp.ne.s32.totalorder %s228, %s229
      %p240 = scmp.eq.s32.totalorder %s26, 0
      %p241 = por %p239, %p240
      %p242 = scmp.ne.s32.totalorder %s228, %s229
      %p243 = scmp.eq.s32.totalorder %s27, 1
      %p244 = por %p242, %p243
      %p246 = scmp.ne.s32.totalorder %s229, %s245
      %p247 = scmp.eq.s32.totalorder %s27, 0
      %p248 = por %p246, %p247
      %s249 = ssub.s32 %s29, %s36
      %p250 = scmp.eq.s32.totalorder %s249, 0
      %s252 = sadd.s32 %s251, 1
      %s253 = scalar_select %p250, %s251, %s252
      %p256 = pneg %p250
      %p257 = scmp.eq.s32.totalorder %s21, 1
      %p258 = por %p256, %p257
      %p259 = scmp.ne.s32.totalorder %s251, %s254
      %p260 = scmp.eq.s32.totalorder %s21, 0
      %p261 = por %p259, %p260
      %p262 = scmp.ne.s32.totalorder %s251, %s254
      %p263 = scmp.eq.s32.totalorder %s26, 1
      %p264 = por %p262, %p263
      %p265 = scmp.ne.s32.totalorder %s254, %s255
      %p266 = scmp.eq.s32.totalorder %s26, 0
      %p267 = por %p265, %p266
      %p268 = scmp.ne.s32.totalorder %s254, %s255
      %p269 = scmp.eq.s32.totalorder %s27, 1
      %p270 = por %p268, %p269
      %p272 = scmp.ne.s32.totalorder %s255, %s271
      %p273 = scmp.eq.s32.totalorder %s27, 0
      %p274 = por %p272, %p273
      %s275 = ssub.s32 %s29, %s36
      %p276 = scmp.eq.s32.totalorder %s275, 0
      %s278 = sadd.s32 %s277, 1
      %s279 = scalar_select %p276, %s277, %s278
      %p282 = pneg %p276
      %p283 = scmp.eq.s32.totalorder %s21, 1
      %p284 = por %p282, %p283
      %p285 = scmp.ne.s32.totalorder %s277, %s280
      %p286 = scmp.eq.s32.totalorder %s21, 0
      %p287 = por %p285, %p286
      %p288 = scmp.ne.s32.totalorder %s277, %s280
      %p289 = scmp.eq.s32.totalorder %s26, 1
      %p290 = por %p288, %p289
      %p291 = scmp.ne.s32.totalorder %s280, %s281
      %p292 = scmp.eq.s32.totalorder %s26, 0
      %p293 = por %p291, %p292
      %p294 = scmp.ne.s32.totalorder %s280, %s281
      %p295 = scmp.eq.s32.totalorder %s27, 1
      %p296 = por %p294, %p295
      %p298 = scmp.ne.s32.totalorder %s281, %s297
      %p299 = scmp.eq.s32.totalorder %s27, 0
      %p300 = por %p298, %p299
      %s301 = ssub.s32 %s29, %s36
      %p302 = scmp.eq.s32.totalorder %s301, 0
      %s304 = sadd.s32 %s303, 1
      %s305 = scalar_select %p302, %s303, %s304
      %p308 = pneg %p302
      %p309 = scmp.eq.s32.totalorder %s21, 1
      %p310 = por %p308, %p309
      %p311 = scmp.ne.s32.totalorder %s303, %s306
      %p312 = scmp.eq.s32.totalorder %s21, 0
      %p313 = por %p311, %p312
      %p314 = scmp.ne.s32.totalorder %s303, %s306
      %p315 = scmp.eq.s32.totalorder %s26, 1
      %p316 = por %p314, %p315
      %p317 = scmp.ne.s32.totalorder %s306, %s307
      %p318 = scmp.eq.s32.totalorder %s26, 0
      %p319 = por %p317, %p318
      %p320 = scmp.ne.s32.totalorder %s306, %s307
      %p321 = scmp.eq.s32.totalorder %s27, 1
      %p322 = por %p320, %p321
      %p324 = scmp.ne.s32.totalorder %s307, %s323
      %p325 = scmp.eq.s32.totalorder %s27, 0
      %p326 = por %p324, %p325
      %s327 = ssub.s32 %s29, %s36
      %p328 = scmp.eq.s32.totalorder %s327, 0
      %s330 = sadd.s32 %s329, 1
      %s331 = scalar_select %p328, %s329, %s330
      %p334 = pneg %p328
      %p335 = scmp.eq.s32.totalorder %s21, 1
      %p336 = por %p334, %p335
      %p337 = scmp.ne.s32.totalorder %s329, %s332
      %p338 = scmp.eq.s32.totalorder %s21, 0
      %p339 = por %p337, %p338
      %p340 = scmp.ne.s32.totalorder %s329, %s332
      %p341 = scmp.eq.s32.totalorder %s26, 1
      %p342 = por %p340, %p341
      %p343 = scmp.ne.s32.totalorder %s332, %s333
      %p344 = scmp.eq.s32.totalorder %s26, 0
      %p345 = por %p343, %p344
      %p346 = scmp.ne.s32.totalorder %s332, %s333
      %p347 = scmp.eq.s32.totalorder %s27, 1
      %p348 = por %p346, %p347
      %p350 = scmp.ne.s32.totalorder %s333, %s349
      %p351 = scmp.eq.s32.totalorder %s27, 0
      %p352 = por %p350, %p351
      %s353 = ssub.s32 %s29, %s36
      %p354 = scmp.eq.s32.totalorder %s353, 0
      %s356 = sadd.s32 %s355, 1
      %s357 = scalar_select %p354, %s355, %s356
      %p360 = pneg %p354
      %p361 = scmp.eq.s32.totalorder %s21, 1
      %p362 = por %p360, %p361
      %p363 = scmp.ne.s32.totalorder %s355, %s358
      %p364 = scmp.eq.s32.totalorder %s21, 0
      %p365 = por %p363, %p364
      %p366 = scmp.ne.s32.totalorder %s355, %s358
      %p367 = scmp.eq.s32.totalorder %s26, 1
      %p368 = por %p366, %p367
      %p369 = scmp.ne.s32.totalorder %s358, %s359
      %p370 = scmp.eq.s32.totalorder %s26, 0
      %p371 = por %p369, %p370
      %p372 = scmp.ne.s32.totalorder %s358, %s359
      %p373 = scmp.eq.s32.totalorder %s27, 1
      %p374 = por %p372, %p373
      %p376 = scmp.ne.s32.totalorder %s359, %s375
      %p377 = scmp.eq.s32.totalorder %s27, 0
      %p378 = por %p376, %p377
      %s379 = ssub.s32 %s28, %s40
      %p380 = scmp.eq.s32.totalorder %s379, 0
      %s382 = sadd.s32 %s381, 1
      %s383 = scalar_select %p380, %s381, %s382
      %p386 = pneg %p380
      %p387 = scmp.eq.s32.totalorder %s21, 1
      %p388 = por %p386, %p387
      %p389 = scmp.ne.s32.totalorder %s381, %s384
      %p390 = scmp.eq.s32.totalorder %s21, 0
      %p391 = por %p389, %p390
      %p392 = scmp.ne.s32.totalorder %s381, %s384
      %p393 = scmp.eq.s32.totalorder %s26, 1
      %p394 = por %p392, %p393
      %p395 = scmp.ne.s32.totalorder %s384, %s385
      %p396 = scmp.eq.s32.totalorder %s26, 0
      %p397 = por %p395, %p396
      %p398 = scmp.ne.s32.totalorder %s384, %s385
      %p399 = scmp.eq.s32.totalorder %s27, 1
      %p400 = por %p398, %p399
      %p402 = scmp.ne.s32.totalorder %s385, %s401
      %p403 = scmp.eq.s32.totalorder %s27, 0
      %p404 = por %p402, %p403
      %p405 = scmp.le.s32.totalorder 1, %s21
      %p406 = scmp.lt.s32.totalorder %s21, 3
      %p407 = pnand %p405, %p406
      %p408 = pneg %p407
      // Predicated region
      $region9: #{tpu_custom_call.1} parent=5 // pred_check
        _
      $region10: #{tpu_custom_call.1} parent=5 // pred_check_branch
        %410 = sbr.rel (%p407) target = $region12
      $region11: #{tpu_custom_call.1} parent=5 // pred_region
        %s411 = ssub.s32 %s21, 1
        // Predicated region
        $region13: #{tpu_custom_call.1} parent=11 // pred_check
          %p412 = pneg %p59
        $region14: #{tpu_custom_call.1} parent=11 // pred_check_branch
          %414 = sbr.rel (%p412) target = $region16
        $region15: #{tpu_custom_call.1} parent=11 // pred_region
          %s415 = smul.u32 2, %s30
          %s417 = ssub.s32 256, 256
          %418 = vsyncadd [#allocation5], %s417
          %s419 = smul.addr %s415, 128
          %s420 = scalar_lea.hbm %s0, %s419
          %s421 = sshll.u32 [#allocation4], 4
          %s422 = int_to_ptr.vmem [resolvable:$true] %s421
          %427 = dma.hbm_to_vmem [thread:$0]  %s420, 256, %s422, [#allocation5], 128, 128, 8
        $region16: #{tpu_custom_call.1} parent=11 // pred_fallthru
          _
      $region12: #{tpu_custom_call.1} parent=5 // pred_fallthru
        _
      %p428 = scmp.lt.s32.totalorder %s21, 2
      // Predicated region
      $region17: #{tpu_custom_call.1} parent=5 // pred_check
        %p429 = pneg %p428
      $region18: #{tpu_custom_call.1} parent=5 // pred_check_branch
        %431 = sbr.rel (%p429) target = $region20
      $region19: #{tpu_custom_call.1} parent=5 // pred_region
        // Predicated region
        $region21: #{tpu_custom_call.1} parent=19 // pred_check
          %p432 = pneg %p79
        $region22: #{tpu_custom_call.1} parent=19 // pred_check_branch
          %434 = sbr.rel (%p432) target = $region24
        $region23: #{tpu_custom_call.1} parent=19 // pred_region
          %p435 = scmp.lt.s32.totalorder %s29, 1
          %s436 = scalar_select %p435, %s29, 1
          %s437 = smul.addr %s436, 4
          %s438 = smul.addr %s437, 8
          %s439 = scalar_lea.vmem %s1, %s438
        $region24: #{tpu_custom_call.1} parent=19 // pred_fallthru
          _
        // Predicated region
        $region25: #{tpu_custom_call.1} parent=19 // pred_check
          %p440 = pneg %p105
        $region26: #{tpu_custom_call.1} parent=19 // pred_check_branch
          %442 = sbr.rel (%p440) target = $region28
        $region27: #{tpu_custom_call.1} parent=19 // pred_region
          %p443 = scmp.lt.s32.totalorder %s29, 1
          %s444 = scalar_select %p443, %s29, 1
          %s445 = scalar_lea.vmem %s2, %s444
        $region28: #{tpu_custom_call.1} parent=19 // pred_fallthru
          _
        // Predicated region
        $region29: #{tpu_custom_call.1} parent=19 // pred_check
          %p446 = pneg %p131
        $region30: #{tpu_custom_call.1} parent=19 // pred_check_branch
          %448 = sbr.rel (%p446) target = $region32
        $region31: #{tpu_custom_call.1} parent=19 // pred_region
          %p449 = scmp.lt.s32.totalorder %s29, 1
          %s450 = scalar_select %p449, %s29, 1
          %s451 = smul.addr %s450, 4
          %s452 = smul.addr %s451, 8
          %s453 = scalar_lea.vmem %s3, %s452
        $region32: #{tpu_custom_call.1} parent=19 // pred_fallthru
          _
        // Predicated region
        $region33: #{tpu_custom_call.1} parent=19 // pred_check
          %p454 = pneg %p157
        $region34: #{tpu_custom_call.1} parent=19 // pred_check_branch
          %456 = sbr.rel (%p454) target = $region36
        $region35: #{tpu_custom_call.1} parent=19 // pred_region
          %p457 = scmp.lt.s32.totalorder %s29, 1
          %s458 = scalar_select %p457, %s29, 1
          %s459 = scalar_lea.vmem %s4, %s458
        $region36: #{tpu_custom_call.1} parent=19 // pred_fallthru
          _
        // Predicated region
        $region37: #{tpu_custom_call.1} parent=19 // pred_check
          %p460 = pneg %p183
        $region38: #{tpu_custom_call.1} parent=19 // pred_check_branch
          %462 = sbr.rel (%p460) target = $region40
        $region39: #{tpu_custom_call.1} parent=19 // pred_region
          %p463 = scmp.lt.s32.totalorder %s29, 1
          %s464 = scalar_select %p463, %s29, 1
          %s465 = scalar_lea.vmem %s5, %s464
        $region40: #{tpu_custom_call.1} parent=19 // pred_fallthru
          _
        // Predicated region
        $region41: #{tpu_custom_call.1} parent=19 // pred_check
          %p466 = pneg %p209
        $region42: #{tpu_custom_call.1} parent=19 // pred_check_branch
          %468 = sbr.rel (%p466) target = $region44
        $region43: #{tpu_custom_call.1} parent=19 // pred_region
          %p469 = scmp.lt.s32.totalorder %s29, 1
          %s470 = scalar_select %p469, %s29, 1
          %s471 = scalar_lea.vmem %s6, %s470
        $region44: #{tpu_custom_call.1} parent=19 // pred_fallthru
          _
        // Predicated region
        $region45: #{tpu_custom_call.1} parent=19 // pred_check
          %p472 = pneg %p235
        $region46: #{tpu_custom_call.1} parent=19 // pred_check_branch
          %474 = sbr.rel (%p472) target = $region48
        $region47: #{tpu_custom_call.1} parent=19 // pred_region
          %p475 = scmp.lt.s32.totalorder %s29, 1
          %s476 = scalar_select %p475, %s29, 1
          %s477 = scalar_lea.vmem %s7, %s476
        $region48: #{tpu_custom_call.1} parent=19 // pred_fallthru
          _
        // Predicated region
        $region49: #{tpu_custom_call.1} parent=19 // pred_check
          %p478 = pneg %p261
        $region50: #{tpu_custom_call.1} parent=19 // pred_check_branch
          %480 = sbr.rel (%p478) target = $region52
        $region51: #{tpu_custom_call.1} parent=19 // pred_region
          %p481 = scmp.lt.s32.totalorder %s29, 1
          %s482 = scalar_select %p481, %s29, 1
          %s483 = scalar_lea.vmem %s8, %s482
        $region52: #{tpu_custom_call.1} parent=19 // pred_fallthru
          _
        // Predicated region
        $region53: #{tpu_custom_call.1} parent=19 // pred_check
          %p484 = pneg %p287
        $region54: #{tpu_custom_call.1} parent=19 // pred_check_branch
          %486 = sbr.rel (%p484) target = $region56
        $region55: #{tpu_custom_call.1} parent=19 // pred_region
          %p487 = scmp.lt.s32.totalorder %s29, 1
          %s488 = scalar_select %p487, %s29, 1
          %s489 = smul.addr %s488, 4
          %s490 = smul.addr %s489, 8
          %s491 = scalar_lea.vmem %s9, %s490
        $region56: #{tpu_custom_call.1} parent=19 // pred_fallthru
          _
        // Predicated region
        $region57: #{tpu_custom_call.1} parent=19 // pred_check
          %p492 = pneg %p313
        $region58: #{tpu_custom_call.1} parent=19 // pred_check_branch
          %494 = sbr.rel (%p492) target = $region60
        $region59: #{tpu_custom_call.1} parent=19 // pred_region
          %p495 = scmp.lt.s32.totalorder %s29, 1
          %s496 = scalar_select %p495, %s29, 1
          %s497 = scalar_lea.vmem %s10, %s496
        $region60: #{tpu_custom_call.1} parent=19 // pred_fallthru
          _
        // Predicated region
        $region61: #{tpu_custom_call.1} parent=19 // pred_check
          %p498 = pneg %p339
        $region62: #{tpu_custom_call.1} parent=19 // pred_check_branch
          %500 = sbr.rel (%p498) target = $region64
        $region63: #{tpu_custom_call.1} parent=19 // pred_region
          %p501 = scmp.lt.s32.totalorder %s29, 1
          %s502 = scalar_select %p501, %s29, 1
          %s503 = smul.addr %s502, 8
          %s504 = smul.addr %s503, 8
          %s505 = scalar_lea.vmem %s11, %s504
        $region64: #{tpu_custom_call.1} parent=19 // pred_fallthru
          _
        // Predicated region
        $region65: #{tpu_custom_call.1} parent=19 // pred_check
          %p506 = pneg %p365
        $region66: #{tpu_custom_call.1} parent=19 // pred_check_branch
          %508 = sbr.rel (%p506) target = $region68
        $region67: #{tpu_custom_call.1} parent=19 // pred_region
          %p509 = scmp.lt.s32.totalorder %s29, 1
          %s510 = scalar_select %p509, %s29, 1
          %s511 = scalar_lea.vmem %s12, %s510
        $region68: #{tpu_custom_call.1} parent=19 // pred_fallthru
          _
      $region20: #{tpu_custom_call.1} parent=5 // pred_fallthru
        _
      %p512 = scmp.le.s32.totalorder 1, %s21
      %p513 = scmp.lt.s32.totalorder %s21, 3
      %p514 = pnand %p512, %p513
      %p515 = pneg %p514
      // Predicated region
      $region69: #{tpu_custom_call.1} parent=5 // pred_check
        _
      $region70: #{tpu_custom_call.1} parent=5 // pred_check_branch
        %517 = sbr.rel (%p514) target = $region72
      $region71: #{tpu_custom_call.1} parent=5 // pred_region
        %s518 = ssub.s32 %s21, 1
        // Predicated region
        $region73: #{tpu_custom_call.1} parent=71 // pred_check
          %p519 = pneg %p59
        $region74: #{tpu_custom_call.1} parent=71 // pred_check_branch
          %521 = sbr.rel (%p519) target = $region76
        $region75: #{tpu_custom_call.1} parent=71 // pred_region
          %522 = dma.done [#allocation5], 256
        $region76: #{tpu_custom_call.1} parent=71 // pred_fallthru
          _
        %p523 = pneg %p59
        %p524 = pneg %p56
        %p525 = scmp.lt.s32.totalorder %s31, 1
        %s526 = scalar_select %p525, %s31, 1
        %s527 = smul.addr %s526, 4
        %s528 = smul.addr %s527, 8
        %s529 = scalar_lea.vmem %s1, %s528
        %p530 = pneg %p85
        %p531 = pneg %p82
        %p532 = scmp.lt.s32.totalorder %s31, 1
        %s533 = scalar_select %p532, %s31, 1
        %s534 = scalar_lea.vmem %s2, %s533
        %p535 = pneg %p111
        %p536 = pneg %p108
        %p537 = scmp.lt.s32.totalorder %s31, 1
        %s538 = scalar_select %p537, %s31, 1
        %s539 = smul.addr %s538, 4
        %s540 = smul.addr %s539, 8
        %s541 = scalar_lea.vmem %s3, %s540
        %p542 = pneg %p137
        %p543 = pneg %p134
        %p544 = scmp.lt.s32.totalorder %s31, 1
        %s545 = scalar_select %p544, %s31, 1
        %s546 = scalar_lea.vmem %s4, %s545
        %p547 = pneg %p163
        %p548 = pneg %p160
        %p549 = scmp.lt.s32.totalorder %s31, 1
        %s550 = scalar_select %p549, %s31, 1
        %s551 = scalar_lea.vmem %s5, %s550
        %p552 = pneg %p189
        %p553 = pneg %p186
        %p554 = scmp.lt.s32.totalorder %s31, 1
        %s555 = scalar_select %p554, %s31, 1
        %s556 = scalar_lea.vmem %s6, %s555
        %p557 = pneg %p215
        %p558 = pneg %p212
        %p559 = scmp.lt.s32.totalorder %s31, 1
        %s560 = scalar_select %p559, %s31, 1
        %s561 = scalar_lea.vmem %s7, %s560
        %p562 = pneg %p241
        %p563 = pneg %p238
        %p564 = scmp.lt.s32.totalorder %s31, 1
        %s565 = scalar_select %p564, %s31, 1
        %s566 = scalar_lea.vmem %s8, %s565
        %p567 = pneg %p267
        %p568 = pneg %p264
        %p569 = scmp.lt.s32.totalorder %s31, 1
        %s570 = scalar_select %p569, %s31, 1
        %s571 = smul.addr %s570, 4
        %s572 = smul.addr %s571, 8
        %s573 = scalar_lea.vmem %s9, %s572
        %p574 = pneg %p293
        %p575 = pneg %p290
        %p576 = scmp.lt.s32.totalorder %s31, 1
        %s577 = scalar_select %p576, %s31, 1
        %s578 = scalar_lea.vmem %s10, %s577
        %p579 = pneg %p319
        %p580 = pneg %p316
        %p581 = scmp.lt.s32.totalorder %s31, 1
        %s582 = scalar_select %p581, %s31, 1
        %s583 = smul.addr %s582, 8
        %s584 = smul.addr %s583, 8
        %s585 = scalar_lea.vmem %s11, %s584
        %p586 = pneg %p345
        %p587 = pneg %p342
        %p588 = scmp.lt.s32.totalorder %s31, 1
        %s589 = scalar_select %p588, %s31, 1
        %s590 = scalar_lea.vmem %s12, %s589
        %p591 = pneg %p371
        %p592 = pneg %p368
        %p593 = pneg %p397
        %p594 = pneg %p394
        %s595 = smul.u32 2, %s30
        %p596 = scmp.lt.s32.totalorder %s31, 1
        %s597 = scalar_select %p596, %s31, 1
        %s598 = smul.addr %s597, 4
        %s599 = smul.addr %s598, 8
        %s600 = scalar_lea.vmem %s1, %s599
        %p601 = scmp.lt.s32.totalorder %s31, 1
        %s602 = scalar_select %p601, %s31, 1
        %s603 = scalar_lea.vmem %s2, %s602
        %p604 = scmp.lt.s32.totalorder %s31, 1
        %s605 = scalar_select %p604, %s31, 1
        %s606 = smul.addr %s605, 4
        %s607 = smul.addr %s606, 8
        %s608 = scalar_lea.vmem %s3, %s607
        %p609 = scmp.lt.s32.totalorder %s31, 1
        %s610 = scalar_select %p609, %s31, 1
        %s611 = scalar_lea.vmem %s4, %s610
        %p612 = scmp.lt.s32.totalorder %s31, 1
        %s613 = scalar_select %p612, %s31, 1
        %s614 = scalar_lea.vmem %s5, %s613
        %p615 = scmp.lt.s32.totalorder %s31, 1
        %s616 = scalar_select %p615, %s31, 1
        %s617 = scalar_lea.vmem %s6, %s616
        %p618 = scmp.lt.s32.totalorder %s31, 1
        %s619 = scalar_select %p618, %s31, 1
        %s620 = scalar_lea.vmem %s7, %s619
        %p621 = scmp.lt.s32.totalorder %s31, 1
        %s622 = scalar_select %p621, %s31, 1
        %s623 = scalar_lea.vmem %s8, %s622
        %p624 = scmp.lt.s32.totalorder %s31, 1
        %s625 = scalar_select %p624, %s31, 1
        %s626 = smul.addr %s625, 4
        %s627 = smul.addr %s626, 8
        %s628 = scalar_lea.vmem %s9, %s627
        %p629 = scmp.lt.s32.totalorder %s31, 1
        %s630 = scalar_select %p629, %s31, 1
        %s631 = scalar_lea.vmem %s10, %s630
        %p632 = scmp.lt.s32.totalorder %s31, 1
        %s633 = scalar_select %p632, %s31, 1
        %s634 = smul.addr %s633, 8
        %s635 = smul.addr %s634, 8
        %s636 = scalar_lea.vmem %s11, %s635
        %p637 = scmp.lt.s32.totalorder %s31, 1
        %s638 = scalar_select %p637, %s31, 1
        %s639 = scalar_lea.vmem %s12, %s638
        %s640 = smul.u32 2, %s30
        %p641 = scmp.eq.s32.totalorder %s31, 0
        // Predicated region
        $region77: #{tpu_custom_call.1} parent=71 // pred_check
          %p642 = pneg %p641
        $region78: #{tpu_custom_call.1} parent=71 // pred_check_branch
          %644 = sbr.rel (%p642) target = $region80
        $region79: #{tpu_custom_call.1} parent=71 // pred_region
          %v645 = vld [vmem:[#allocation4] sm:$0xff]
          %v646 = vld [vmem:[#allocation4 + $0x8] sm:$0xff]
          %vm647 = vcmask 261120
          %648 = vst.msk [vmem:[#allocation2] sm:$0xff] %vm647, %v645
          %649 = vst.msk [vmem:[#allocation2 + $0x8] sm:$0xff] %vm647, %v646
        $region80: #{tpu_custom_call.1} parent=71 // pred_fallthru
          _
        %v650 = vld [vmem:[#allocation2] sm:$0xff]
        %v651 = vld [vmem:[#allocation2 + $0x8] sm:$0xff]
        %v652 = vld [vmem:[%s600] sm:$0xff]
        %v653 = vld [vmem:[%s600 + $0x8] sm:$0xff]
        %v654 = vld [vmem:[%s600 + $0x10] sm:$0xff]
        %v655 = vld [vmem:[%s600 + $0x18] sm:$0xff]
        %v656 = vld [vmem:[%s603] sm:$0x1]
        %v658 = vlaneseq
        %v659 = vshrl.u32 %v658, 7
        %v660 = vsub.s32 0, %v659
        %v661 = vrot.slane %v656, %v660
        %vm663 = vcmask 261120
        %v665 = vsel %vm663, %v650, 0
        %v668 = vsel %vm663, %v651, 0
        %670 = vmatprep.subr.mxu0 0.0
        %671 = vmatpush1.msra.mxu0 %v652
        %672 = vmatprep.subr.mxu0 0.0
        %673 = vmatpush1.msra.mxu0 %v653
        %674 = vmatprep.subr.mxu0 0.0
        %675 = vmatpush1.msra.mxu0 %v654
        %676 = vmatprep.subr.mxu0 0.0
        %677 = vmatpush1.msra.mxu0 %v655
        %678 = vmatprep.subr.mxu0 0.0
        %679 = vmatpush1.msra.mxu0 0.0
        %680 = vmatprep.subr.mxu0 0.0
        %681 = vmatpush1.msra.mxu0 0.0
        %682 = vmatprep.subr.mxu0 0.0
        %683 = vmatpush1.msra.mxu0 0.0
        %684 = vmatprep.subr.mxu0 0.0
        %685 = vmatpush1.msra.mxu0 0.0
        %686 = vmatprep.subr.mxu0 0.0
        %687 = vmatpush1.msra.mxu0 0.0
        %688 = vmatprep.subr.mxu0 0.0
        %689 = vmatpush1.msra.mxu0 0.0
        %690 = vmatprep.subr.mxu0 0.0
        %691 = vmatpush1.msra.mxu0 0.0
        %692 = vmatprep.subr.mxu0 0.0
        %693 = vmatpush1.msra.mxu0 0.0
        %694 = vmatprep.subr.mxu0 0.0
        %695 = vmatpush1.msra.mxu0 0.0
        %696 = vmatprep.subr.mxu0 0.0
        %697 = vmatpush1.msra.mxu0 0.0
        %698 = vmatprep.subr.mxu0 0.0
        %699 = vmatpush1.msra.mxu0 0.0
        %700 = vmatprep.subr.mxu0 0.0
        %701 = vmatpush1.msra.mxu0 0.0
        %702 = vmatprep.subr.mxu0 0.0
        %703 = vmatpush1.msra.mxu0 0.0
        %704 = vmatprep.subr.mxu0 0.0
        %705 = vmatpush1.msra.mxu0 0.0
        %706 = vmatprep.subr.mxu0 0.0
        %707 = vmatpush1.msra.mxu0 0.0
        %708 = vmatprep.subr.mxu0 0.0
        %709 = vmatpush1.msra.mxu0 0.0
        %710 = vmatprep.subr.mxu0 0.0
        %711 = vmatpush1.msra.mxu0 0.0
        %712 = vmatprep.subr.mxu0 0.0
        %713 = vmatpush1.msra.mxu0 0.0
        %714 = vmatprep.subr.mxu0 0.0
        %715 = vmatpush1.msra.mxu0 0.0
        %716 = vmatprep.subr.mxu0 0.0
        %717 = vmatpush1.msra.mxu0 0.0
        %718 = vmatprep.subr.mxu0 0.0
        %719 = vmatpush1.msra.mxu0 0.0
        %720 = vmatprep.subr.mxu0 0.0
        %721 = vmatpush1.msra.mxu0 0.0
        %722 = vmatprep.subr.mxu0 0.0
        %723 = vmatpush1.msra.mxu0 0.0
        %724 = vmatprep.subr.mxu0 0.0
        %725 = vmatpush1.msra.mxu0 0.0
        %726 = vmatprep.subr.mxu0 0.0
        %727 = vmatpush1.msra.mxu0 0.0
        %728 = vmatprep.subr.mxu0 0.0
        %729 = vmatpush1.msra.mxu0 0.0
        %730 = vmatprep.subr.mxu0 0.0
        %731 = vmatpush1.msra.mxu0 0.0
        %732 = vmatprep.subr.mxu0 0.0
        %733 = vmatpush1.msra.mxu0 0.0
        %734 = vmatprep.mubr.f32.mxu0 0.0
        %735 = vmatmul.mubr.f32.gmra.mrb[0].mxu0 %v665
        %v736 = vpop.f32.mrb[0].mxu0
        %v737 = vadd.f32 %v661, %v736
        %v738 = vpop.f32.mrb[0].mxu0
        %739 = vmatprep.mubr.f32.mxu0 0.0
        %740 = vmatmul.mubr.f32.gmra.mrb[0].mxu0 %v668
        %v741 = vpop.f32.mrb[0].mxu0
        %v742 = vadd.f32 %v661, %v741
        %v743 = vpop.f32.mrb[0].mxu0
        %744 = vdwg.mxu0
        %v745 = vmul.f32 %v737, 0.35355338
        %v746 = vmul.f32 %v742, 0.35355338
        %748 = vrot.lane.b32.xlu0 %v737, 96
        %v749 = vpop.permute.xlu0 %748
        %vm750 = vcmask 64512
        %v752 = vsel %vm750, %v745, 0
        %v754 = vsel %vm750, %v749, 0
        %756 = vmatprep.subr.mxu0 0.0
        %757 = vmatpush1.xpose.msra.mxu0 %v754
        %758 = vmatprep.subr.mxu0 0.0
        %759 = vmatpush1.xpose.msra.mxu0 0.0
        %760 = vmatprep.subr.mxu0 0.0
        %761 = vmatpush1.xpose.msra.mxu0 0.0
        %762 = vmatprep.subr.mxu0 0.0
        %763 = vmatpush1.xpose.msra.mxu0 0.0
        %764 = vmatprep.subr.mxu0 0.0
        %765 = vmatpush1.xpose.msra.mxu0 0.0
        %766 = vmatprep.subr.mxu0 0.0
        %767 = vmatpush1.xpose.msra.mxu0 0.0
        %768 = vmatprep.subr.mxu0 0.0
        %769 = vmatpush1.xpose.msra.mxu0 0.0
        %770 = vmatprep.subr.mxu0 0.0
        %771 = vmatpush1.xpose.msra.mxu0 0.0
        %772 = vmatprep.subr.mxu0 0.0
        %773 = vmatpush1.xpose.msra.mxu0 0.0
        %774 = vmatprep.subr.mxu0 0.0
        %775 = vmatpush1.xpose.msra.mxu0 0.0
        %776 = vmatprep.subr.mxu0 0.0
        %777 = vmatpush1.xpose.msra.mxu0 0.0
        %778 = vmatprep.subr.mxu0 0.0
        %779 = vmatpush1.xpose.msra.mxu0 0.0
        %780 = vmatprep.subr.mxu0 0.0
        %781 = vmatpush1.xpose.msra.mxu0 0.0
        %782 = vmatprep.subr.mxu0 0.0
        %783 = vmatpush1.xpose.msra.mxu0 0.0
        %784 = vmatprep.subr.mxu0 0.0
        %785 = vmatpush1.xpose.msra.mxu0 0.0
        %786 = vmatprep.subr.mxu0 0.0
        %787 = vmatpush1.xpose.msra.mxu0 0.0
        %788 = vmatprep.subr.mxu0 0.0
        %789 = vmatpush1.xpose.msra.mxu0 0.0
        %790 = vmatprep.subr.mxu0 0.0
        %791 = vmatpush1.xpose.msra.mxu0 0.0
        %792 = vmatprep.subr.mxu0 0.0
        %793 = vmatpush1.xpose.msra.mxu0 0.0
        %794 = vmatprep.subr.mxu0 0.0
        %795 = vmatpush1.xpose.msra.mxu0 0.0
        %796 = vmatprep.subr.mxu0 0.0
        %797 = vmatpush1.xpose.msra.mxu0 0.0
        %798 = vmatprep.subr.mxu0 0.0
        %799 = vmatpush1.xpose.msra.mxu0 0.0
        %800 = vmatprep.subr.mxu0 0.0
        %801 = vmatpush1.xpose.msra.mxu0 0.0
        %802 = vmatprep.subr.mxu0 0.0
        %803 = vmatpush1.xpose.msra.mxu0 0.0
        %804 = vmatprep.subr.mxu0 0.0
        %805 = vmatpush1.xpose.msra.mxu0 0.0
        %806 = vmatprep.subr.mxu0 0.0
        %807 = vmatpush1.xpose.msra.mxu0 0.0
        %808 = vmatprep.subr.mxu0 0.0
        %809 = vmatpush1.xpose.msra.mxu0 0.0
        %810 = vmatprep.subr.mxu0 0.0
        %811 = vmatpush1.xpose.msra.mxu0 0.0
        %812 = vmatprep.subr.mxu0 0.0
        %813 = vmatpush1.xpose.msra.mxu0 0.0
        %814 = vmatprep.subr.mxu0 0.0
        %815 = vmatpush1.xpose.msra.mxu0 0.0
        %816 = vmatprep.subr.mxu0 0.0
        %817 = vmatpush1.xpose.msra.mxu0 0.0
        %818 = vmatprep.subr.mxu0 0.0
        %819 = vmatpush1.xpose.msra.mxu0 0.0
        %820 = vmatprep.mubr.f32.mxu0 0.0
        %821 = vmatmul.mubr.f32.gmra.mrb[0].mxu0 %v752
        %v822 = vpop.f32.mrb[0].mxu0
        %v823 = vadd.f32 0.0, %v822
        %v824 = vpop.f32.mrb[0].mxu0
        %825 = vdwg.mxu0
        %827 = vrot.lane.b32.xlu0 %v742, 96
        %v828 = vpop.permute.xlu0 %827
        %v830 = vsel %vm750, %v746, 0
        %v832 = vsel %vm750, %v828, 0
        %834 = vmatprep.subr.mxu0 0.0
        %835 = vmatpush1.xpose.msra.mxu0 %v832
        %836 = vmatprep.subr.mxu0 0.0
        %837 = vmatpush1.xpose.msra.mxu0 0.0
        %838 = vmatprep.subr.mxu0 0.0
        %839 = vmatpush1.xpose.msra.mxu0 0.0
        %840 = vmatprep.subr.mxu0 0.0
        %841 = vmatpush1.xpose.msra.mxu0 0.0
        %842 = vmatprep.subr.mxu0 0.0
        %843 = vmatpush1.xpose.msra.mxu0 0.0
        %844 = vmatprep.subr.mxu0 0.0
        %845 = vmatpush1.xpose.msra.mxu0 0.0
        %846 = vmatprep.subr.mxu0 0.0
        %847 = vmatpush1.xpose.msra.mxu0 0.0
        %848 = vmatprep.subr.mxu0 0.0
        %849 = vmatpush1.xpose.msra.mxu0 0.0
        %850 = vmatprep.subr.mxu0 0.0
        %851 = vmatpush1.xpose.msra.mxu0 0.0
        %852 = vmatprep.subr.mxu0 0.0
        %853 = vmatpush1.xpose.msra.mxu0 0.0
        %854 = vmatprep.subr.mxu0 0.0
        %855 = vmatpush1.xpose.msra.mxu0 0.0
        %856 = vmatprep.subr.mxu0 0.0
        %857 = vmatpush1.xpose.msra.mxu0 0.0
        %858 = vmatprep.subr.mxu0 0.0
        %859 = vmatpush1.xpose.msra.mxu0 0.0
        %860 = vmatprep.subr.mxu0 0.0
        %861 = vmatpush1.xpose.msra.mxu0 0.0
        %862 = vmatprep.subr.mxu0 0.0
        %863 = vmatpush1.xpose.msra.mxu0 0.0
        %864 = vmatprep.subr.mxu0 0.0
        %865 = vmatpush1.xpose.msra.mxu0 0.0
        %866 = vmatprep.subr.mxu0 0.0
        %867 = vmatpush1.xpose.msra.mxu0 0.0
        %868 = vmatprep.subr.mxu0 0.0
        %869 = vmatpush1.xpose.msra.mxu0 0.0
        %870 = vmatprep.subr.mxu0 0.0
        %871 = vmatpush1.xpose.msra.mxu0 0.0
        %872 = vmatprep.subr.mxu0 0.0
        %873 = vmatpush1.xpose.msra.mxu0 0.0
        %874 = vmatprep.subr.mxu0 0.0
        %875 = vmatpush1.xpose.msra.mxu0 0.0
        %876 = vmatprep.subr.mxu0 0.0
        %877 = vmatpush1.xpose.msra.mxu0 0.0
        %878 = vmatprep.subr.mxu0 0.0
        %879 = vmatpush1.xpose.msra.mxu0 0.0
        %880 = vmatprep.subr.mxu0 0.0
        %881 = vmatpush1.xpose.msra.mxu0 0.0
        %882 = vmatprep.subr.mxu0 0.0
        %883 = vmatpush1.xpose.msra.mxu0 0.0
        %884 = vmatprep.subr.mxu0 0.0
        %885 = vmatpush1.xpose.msra.mxu0 0.0
        %886 = vmatprep.subr.mxu0 0.0
        %887 = vmatpush1.xpose.msra.mxu0 0.0
        %888 = vmatprep.subr.mxu0 0.0
        %889 = vmatpush1.xpose.msra.mxu0 0.0
        %890 = vmatprep.subr.mxu0 0.0
        %891 = vmatpush1.xpose.msra.mxu0 0.0
        %892 = vmatprep.subr.mxu0 0.0
        %893 = vmatpush1.xpose.msra.mxu0 0.0
        %894 = vmatprep.subr.mxu0 0.0
        %895 = vmatpush1.xpose.msra.mxu0 0.0
        %896 = vmatprep.subr.mxu0 0.0
        %897 = vmatpush1.xpose.msra.mxu0 0.0
        %898 = vmatprep.mubr.f32.mxu0 0.0
        %899 = vmatmul.mubr.f32.gmra.mrb[0].mxu0 %v830
        %v900 = vpop.f32.mrb[0].mxu0
        %v901 = vadd.f32 0.0, %v900
        %v902 = vpop.f32.mrb[0].mxu0
        %903 = vdwg.mxu0
        %v904 = vsel %vm750, %v823, -inf
        %905 = vmax.xlane.f32.xlu0 %v904
        %v906 = vpop.xlane.xlu0 %905
        %v907 = vsel %vm750, %v901, -inf
        %908 = vmax.xlane.f32.xlu0 %v907
        %v909 = vpop.xlane.xlu0 %908
        %v910 = vsub.f32 %v823, %v906
        %v911 = vsub.f32 %v901, %v909
        %v912 = vmul.f32 %v910, 1.442695
        %v913 = vpow.pop %v912
        %v914 = vmul.f32 %v911, 1.442695
        %v915 = vpow.pop %v914
        %v916 = vsel %vm750, %v913, 0.0
        %917 = vadd.xlane.f32.xlu0 %v916
        %v918 = vpop.xlane.xlu0 %917
        %v919 = vsel %vm750, %v915, 0.0
        %920 = vadd.xlane.f32.xlu0 %v919
        %v921 = vpop.xlane.xlu0 %920
        %v922 = vrcp.pop %v918
        %v923 = vrcp.pop %v921
        %v924 = vmul.f32 %v913, %v922
        %v925 = vmul.f32 %v915, %v923
        %926 = vrot.lane.b32.xlu0 %v737, 64
        %v927 = vpop.permute.xlu0 %926
        %v930 = vsel %vm750, %v924, 0
        %932 = vmatprep.subr.mxu0 0.0
        %933 = vmatpush1.msra.mxu0 %v927
        %934 = vmatprep.subr.mxu0 0.0
        %935 = vmatpush1.msra.mxu0 0.0
        %936 = vmatprep.subr.mxu0 0.0
        %937 = vmatpush1.msra.mxu0 0.0
        %938 = vmatprep.subr.mxu0 0.0
        %939 = vmatpush1.msra.mxu0 0.0
        %940 = vmatprep.subr.mxu0 0.0
        %941 = vmatpush1.msra.mxu0 0.0
        %942 = vmatprep.subr.mxu0 0.0
        %943 = vmatpush1.msra.mxu0 0.0
        %944 = vmatprep.subr.mxu0 0.0
        %945 = vmatpush1.msra.mxu0 0.0
        %946 = vmatprep.subr.mxu0 0.0
        %947 = vmatpush1.msra.mxu0 0.0
        %948 = vmatprep.subr.mxu0 0.0
        %949 = vmatpush1.msra.mxu0 0.0
        %950 = vmatprep.subr.mxu0 0.0
        %951 = vmatpush1.msra.mxu0 0.0
        %952 = vmatprep.subr.mxu0 0.0
        %953 = vmatpush1.msra.mxu0 0.0
        %954 = vmatprep.subr.mxu0 0.0
        %955 = vmatpush1.msra.mxu0 0.0
        %956 = vmatprep.subr.mxu0 0.0
        %957 = vmatpush1.msra.mxu0 0.0
        %958 = vmatprep.subr.mxu0 0.0
        %959 = vmatpush1.msra.mxu0 0.0
        %960 = vmatprep.subr.mxu0 0.0
        %961 = vmatpush1.msra.mxu0 0.0
        %962 = vmatprep.subr.mxu0 0.0
        %963 = vmatpush1.msra.mxu0 0.0
        %964 = vmatprep.subr.mxu0 0.0
        %965 = vmatpush1.msra.mxu0 0.0
        %966 = vmatprep.subr.mxu0 0.0
        %967 = vmatpush1.msra.mxu0 0.0
        %968 = vmatprep.subr.mxu0 0.0
        %969 = vmatpush1.msra.mxu0 0.0
        %970 = vmatprep.subr.mxu0 0.0
        %971 = vmatpush1.msra.mxu0 0.0
        %972 = vmatprep.subr.mxu0 0.0
        %973 = vmatpush1.msra.mxu0 0.0
        %974 = vmatprep.subr.mxu0 0.0
        %975 = vmatpush1.msra.mxu0 0.0
        %976 = vmatprep.subr.mxu0 0.0
        %977 = vmatpush1.msra.mxu0 0.0
        %978 = vmatprep.subr.mxu0 0.0
        %979 = vmatpush1.msra.mxu0 0.0
        %980 = vmatprep.subr.mxu0 0.0
        %981 = vmatpush1.msra.mxu0 0.0
        %982 = vmatprep.subr.mxu0 0.0
        %983 = vmatpush1.msra.mxu0 0.0
        %984 = vmatprep.subr.mxu0 0.0
        %985 = vmatpush1.msra.mxu0 0.0
        %986 = vmatprep.subr.mxu0 0.0
        %987 = vmatpush1.msra.mxu0 0.0
        %988 = vmatprep.subr.mxu0 0.0
        %989 = vmatpush1.msra.mxu0 0.0
        %990 = vmatprep.subr.mxu0 0.0
        %991 = vmatpush1.msra.mxu0 0.0
        %992 = vmatprep.subr.mxu0 0.0
        %993 = vmatpush1.msra.mxu0 0.0
        %994 = vmatprep.subr.mxu0 0.0
        %995 = vmatpush1.msra.mxu0 0.0
        %996 = vmatprep.mubr.f32.mxu0 0.0
        %997 = vmatmul.mubr.f32.gmra.mrb[0].mxu0 %v930
        %v998 = vpop.f32.mrb[0].mxu0
        %v999 = vadd.f32 0.0, %v998
        %v1000 = vpop.f32.mrb[0].mxu0
        %1001 = vdwg.mxu0
        %1002 = vrot.lane.b32.xlu0 %v742, 64
        %v1003 = vpop.permute.xlu0 %1002
        %v1006 = vsel %vm750, %v925, 0
        %1008 = vmatprep.subr.mxu0 0.0
        %1009 = vmatpush1.msra.mxu0 %v1003
        %1010 = vmatprep.subr.mxu0 0.0
        %1011 = vmatpush1.msra.mxu0 0.0
        %1012 = vmatprep.subr.mxu0 0.0
        %1013 = vmatpush1.msra.mxu0 0.0
        %1014 = vmatprep.subr.mxu0 0.0
        %1015 = vmatpush1.msra.mxu0 0.0
        %1016 = vmatprep.subr.mxu0 0.0
        %1017 = vmatpush1.msra.mxu0 0.0
        %1018 = vmatprep.subr.mxu0 0.0
        %1019 = vmatpush1.msra.mxu0 0.0
        %1020 = vmatprep.subr.mxu0 0.0
        %1021 = vmatpush1.msra.mxu0 0.0
        %1022 = vmatprep.subr.mxu0 0.0
        %1023 = vmatpush1.msra.mxu0 0.0
        %1024 = vmatprep.subr.mxu0 0.0
        %1025 = vmatpush1.msra.mxu0 0.0
        %1026 = vmatprep.subr.mxu0 0.0
        %1027 = vmatpush1.msra.mxu0 0.0
        %1028 = vmatprep.subr.mxu0 0.0
        %1029 = vmatpush1.msra.mxu0 0.0
        %1030 = vmatprep.subr.mxu0 0.0
        %1031 = vmatpush1.msra.mxu0 0.0
        %1032 = vmatprep.subr.mxu0 0.0
        %1033 = vmatpush1.msra.mxu0 0.0
        %1034 = vmatprep.subr.mxu0 0.0
        %1035 = vmatpush1.msra.mxu0 0.0
        %1036 = vmatprep.subr.mxu0 0.0
        %1037 = vmatpush1.msra.mxu0 0.0
        %1038 = vmatprep.subr.mxu0 0.0
        %1039 = vmatpush1.msra.mxu0 0.0
        %1040 = vmatprep.subr.mxu0 0.0
        %1041 = vmatpush1.msra.mxu0 0.0
        %1042 = vmatprep.subr.mxu0 0.0
        %1043 = vmatpush1.msra.mxu0 0.0
        %1044 = vmatprep.subr.mxu0 0.0
        %1045 = vmatpush1.msra.mxu0 0.0
        %1046 = vmatprep.subr.mxu0 0.0
        %1047 = vmatpush1.msra.mxu0 0.0
        %1048 = vmatprep.subr.mxu0 0.0
        %1049 = vmatpush1.msra.mxu0 0.0
        %1050 = vmatprep.subr.mxu0 0.0
        %1051 = vmatpush1.msra.mxu0 0.0
        %1052 = vmatprep.subr.mxu0 0.0
        %1053 = vmatpush1.msra.mxu0 0.0
        %1054 = vmatprep.subr.mxu0 0.0
        %1055 = vmatpush1.msra.mxu0 0.0
        %1056 = vmatprep.subr.mxu0 0.0
        %1057 = vmatpush1.msra.mxu0 0.0
        %1058 = vmatprep.subr.mxu0 0.0
        %1059 = vmatpush1.msra.mxu0 0.0
        %1060 = vmatprep.subr.mxu0 0.0
        %1061 = vmatpush1.msra.mxu0 0.0
        %1062 = vmatprep.subr.mxu0 0.0
        %1063 = vmatpush1.msra.mxu0 0.0
        %1064 = vmatprep.subr.mxu0 0.0
        %1065 = vmatpush1.msra.mxu0 0.0
        %1066 = vmatprep.subr.mxu0 0.0
        %1067 = vmatpush1.msra.mxu0 0.0
        %1068 = vmatprep.subr.mxu0 0.0
        %1069 = vmatpush1.msra.mxu0 0.0
        %1070 = vmatprep.subr.mxu0 0.0
        %1071 = vmatpush1.msra.mxu0 0.0
        %1072 = vmatprep.mubr.f32.mxu0 0.0
        %1073 = vmatmul.mubr.f32.gmra.mrb[0].mxu0 %v1006
        %v1074 = vpop.f32.mrb[0].mxu0
        %v1075 = vadd.f32 0.0, %v1074
        %v1076 = vpop.f32.mrb[0].mxu0
        %1077 = vdwg.mxu0
        %1078 = vst.msk [vmem:[#allocation3] sm:$0xff] %vm750, %v999
        %1079 = vst.msk [vmem:[#allocation3 + $0x8] sm:$0xff] %vm750, %v1075
        %1080 = vrot.lane.b32.xlu0 %v745, 120
        %v1081 = vpop.permute.xlu0 %1080
        %1082 = vrot.lane.b32.xlu0 %v737, 88
        %v1083 = vpop.permute.xlu0 %1082
        %v1084 = vsel %vm750, %v1081, 0
        %v1086 = vsel %vm750, %v1083, 0
        %1088 = vmatprep.subr.mxu0 0.0
        %1089 = vmatpush1.xpose.msra.mxu0 %v1086
        %1090 = vmatprep.subr.mxu0 0.0
        %1091 = vmatpush1.xpose.msra.mxu0 0.0
        %1092 = vmatprep.subr.mxu0 0.0
        %1093 = vmatpush1.xpose.msra.mxu0 0.0
        %1094 = vmatprep.subr.mxu0 0.0
        %1095 = vmatpush1.xpose.msra.mxu0 0.0
        %1096 = vmatprep.subr.mxu0 0.0
        %1097 = vmatpush1.xpose.msra.mxu0 0.0
        %1098 = vmatprep.subr.mxu0 0.0
        %1099 = vmatpush1.xpose.msra.mxu0 0.0
        %1100 = vmatprep.subr.mxu0 0.0
        %1101 = vmatpush1.xpose.msra.mxu0 0.0
        %1102 = vmatprep.subr.mxu0 0.0
        %1103 = vmatpush1.xpose.msra.mxu0 0.0
        %1104 = vmatprep.subr.mxu0 0.0
        %1105 = vmatpush1.xpose.msra.mxu0 0.0
        %1106 = vmatprep.subr.mxu0 0.0
        %1107 = vmatpush1.xpose.msra.mxu0 0.0
        %1108 = vmatprep.subr.mxu0 0.0
        %1109 = vmatpush1.xpose.msra.mxu0 0.0
        %1110 = vmatprep.subr.mxu0 0.0
        %1111 = vmatpush1.xpose.msra.mxu0 0.0
        %1112 = vmatprep.subr.mxu0 0.0
        %1113 = vmatpush1.xpose.msra.mxu0 0.0
        %1114 = vmatprep.subr.mxu0 0.0
        %1115 = vmatpush1.xpose.msra.mxu0 0.0
        %1116 = vmatprep.subr.mxu0 0.0
        %1117 = vmatpush1.xpose.msra.mxu0 0.0
        %1118 = vmatprep.subr.mxu0 0.0
        %1119 = vmatpush1.xpose.msra.mxu0 0.0
        %1120 = vmatprep.subr.mxu0 0.0
        %1121 = vmatpush1.xpose.msra.mxu0 0.0
        %1122 = vmatprep.subr.mxu0 0.0
        %1123 = vmatpush1.xpose.msra.mxu0 0.0
        %1124 = vmatprep.subr.mxu0 0.0
        %1125 = vmatpush1.xpose.msra.mxu0 0.0
        %1126 = vmatprep.subr.mxu0 0.0
        %1127 = vmatpush1.xpose.msra.mxu0 0.0
        %1128 = vmatprep.subr.mxu0 0.0
        %1129 = vmatpush1.xpose.msra.mxu0 0.0
        %1130 = vmatprep.subr.mxu0 0.0
        %1131 = vmatpush1.xpose.msra.mxu0 0.0
        %1132 = vmatprep.subr.mxu0 0.0
        %1133 = vmatpush1.xpose.msra.mxu0 0.0
        %1134 = vmatprep.subr.mxu0 0.0
        %1135 = vmatpush1.xpose.msra.mxu0 0.0
        %1136 = vmatprep.subr.mxu0 0.0
        %1137 = vmatpush1.xpose.msra.mxu0 0.0
        %1138 = vmatprep.subr.mxu0 0.0
        %1139 = vmatpush1.xpose.msra.mxu0 0.0
        %1140 = vmatprep.subr.mxu0 0.0
        %1141 = vmatpush1.xpose.msra.mxu0 0.0
        %1142 = vmatprep.subr.mxu0 0.0
        %1143 = vmatpush1.xpose.msra.mxu0 0.0
        %1144 = vmatprep.subr.mxu0 0.0
        %1145 = vmatpush1.xpose.msra.mxu0 0.0
        %1146 = vmatprep.subr.mxu0 0.0
        %1147 = vmatpush1.xpose.msra.mxu0 0.0
        %1148 = vmatprep.subr.mxu0 0.0
        %1149 = vmatpush1.xpose.msra.mxu0 0.0
        %1150 = vmatprep.subr.mxu0 0.0
        %1151 = vmatpush1.xpose.msra.mxu0 0.0
        %1152 = vmatprep.mubr.f32.mxu0 0.0
        %1153 = vmatmul.mubr.f32.gmra.mrb[0].mxu0 %v1084
        %v1154 = vpop.f32.mrb[0].mxu0
        %v1155 = vadd.f32 0.0, %v1154
        %v1156 = vpop.f32.mrb[0].mxu0
        %1157 = vdwg.mxu0
        %1158 = vrot.lane.b32.xlu0 %v746, 120
        %v1159 = vpop.permute.xlu0 %1158
        %1160 = vrot.lane.b32.xlu0 %v742, 88
        %v1161 = vpop.permute.xlu0 %1160
        %v1162 = vsel %vm750, %v1159, 0
        %v1164 = vsel %vm750, %v1161, 0
        %1166 = vmatprep.subr.mxu0 0.0
        %1167 = vmatpush1.xpose.msra.mxu0 %v1164
        %1168 = vmatprep.subr.mxu0 0.0
        %1169 = vmatpush1.xpose.msra.mxu0 0.0
        %1170 = vmatprep.subr.mxu0 0.0
        %1171 = vmatpush1.xpose.msra.mxu0 0.0
        %1172 = vmatprep.subr.mxu0 0.0
        %1173 = vmatpush1.xpose.msra.mxu0 0.0
        %1174 = vmatprep.subr.mxu0 0.0
        %1175 = vmatpush1.xpose.msra.mxu0 0.0
        %1176 = vmatprep.subr.mxu0 0.0
        %1177 = vmatpush1.xpose.msra.mxu0 0.0
        %1178 = vmatprep.subr.mxu0 0.0
        %1179 = vmatpush1.xpose.msra.mxu0 0.0
        %1180 = vmatprep.subr.mxu0 0.0
        %1181 = vmatpush1.xpose.msra.mxu0 0.0
        %1182 = vmatprep.subr.mxu0 0.0
        %1183 = vmatpush1.xpose.msra.mxu0 0.0
        %1184 = vmatprep.subr.mxu0 0.0
        %1185 = vmatpush1.xpose.msra.mxu0 0.0
        %1186 = vmatprep.subr.mxu0 0.0
        %1187 = vmatpush1.xpose.msra.mxu0 0.0
        %1188 = vmatprep.subr.mxu0 0.0
        %1189 = vmatpush1.xpose.msra.mxu0 0.0
        %1190 = vmatprep.subr.mxu0 0.0
        %1191 = vmatpush1.xpose.msra.mxu0 0.0
        %1192 = vmatprep.subr.mxu0 0.0
        %1193 = vmatpush1.xpose.msra.mxu0 0.0
        %1194 = vmatprep.subr.mxu0 0.0
        %1195 = vmatpush1.xpose.msra.mxu0 0.0
        %1196 = vmatprep.subr.mxu0 0.0
        %1197 = vmatpush1.xpose.msra.mxu0 0.0
        %1198 = vmatprep.subr.mxu0 0.0
        %1199 = vmatpush1.xpose.msra.mxu0 0.0
        %1200 = vmatprep.subr.mxu0 0.0
        %1201 = vmatpush1.xpose.msra.mxu0 0.0
        %1202 = vmatprep.subr.mxu0 0.0
        %1203 = vmatpush1.xpose.msra.mxu0 0.0
        %1204 = vmatprep.subr.mxu0 0.0
        %1205 = vmatpush1.xpose.msra.mxu0 0.0
        %1206 = vmatprep.subr.mxu0 0.0
        %1207 = vmatpush1.xpose.msra.mxu0 0.0
        %1208 = vmatprep.subr.mxu0 0.0
        %1209 = vmatpush1.xpose.msra.mxu0 0.0
        %1210 = vmatprep.subr.mxu0 0.0
        %1211 = vmatpush1.xpose.msra.mxu0 0.0
        %1212 = vmatprep.subr.mxu0 0.0
        %1213 = vmatpush1.xpose.msra.mxu0 0.0
        %1214 = vmatprep.subr.mxu0 0.0
        %1215 = vmatpush1.xpose.msra.mxu0 0.0
        %1216 = vmatprep.subr.mxu0 0.0
        %1217 = vmatpush1.xpose.msra.mxu0 0.0
        %1218 = vmatprep.subr.mxu0 0.0
        %1219 = vmatpush1.xpose.msra.mxu0 0.0
        %1220 = vmatprep.subr.mxu0 0.0
        %1221 = vmatpush1.xpose.msra.mxu0 0.0
        %1222 = vmatprep.subr.mxu0 0.0
        %1223 = vmatpush1.xpose.msra.mxu0 0.0
        %1224 = vmatprep.subr.mxu0 0.0
        %1225 = vmatpush1.xpose.msra.mxu0 0.0
        %1226 = vmatprep.subr.mxu0 0.0
        %1227 = vmatpush1.xpose.msra.mxu0 0.0
        %1228 = vmatprep.subr.mxu0 0.0
        %1229 = vmatpush1.xpose.msra.mxu0 0.0
        %1230 = vmatprep.mubr.f32.mxu0 0.0
        %1231 = vmatmul.mubr.f32.gmra.mrb[0].mxu0 %v1162
        %v1232 = vpop.f32.mrb[0].mxu0
        %v1233 = vadd.f32 0.0, %v1232
        %v1234 = vpop.f32.mrb[0].mxu0
        %1235 = vdwg.mxu0
        %v1236 = vsel %vm750, %v1155, -inf
        %1237 = vmax.xlane.f32.xlu0 %v1236
        %v1238 = vpop.xlane.xlu0 %1237
        %v1239 = vsel %vm750, %v1233, -inf
        %1240 = vmax.xlane.f32.xlu0 %v1239
        %v1241 = vpop.xlane.xlu0 %1240
        %v1242 = vsub.f32 %v1155, %v1238
        %v1243 = vsub.f32 %v1233, %v1241
        %v1244 = vmul.f32 %v1242, 1.442695
        %v1245 = vpow.pop %v1244
        %v1246 = vmul.f32 %v1243, 1.442695
        %v1247 = vpow.pop %v1246
        %v1248 = vsel %vm750, %v1245, 0.0
        %1249 = vadd.xlane.f32.xlu0 %v1248
        %v1250 = vpop.xlane.xlu0 %1249
        %v1251 = vsel %vm750, %v1247, 0.0
        %1252 = vadd.xlane.f32.xlu0 %v1251
        %v1253 = vpop.xlane.xlu0 %1252
        %v1254 = vrcp.pop %v1250
        %v1255 = vrcp.pop %v1253
        %v1256 = vmul.f32 %v1245, %v1254
        %v1257 = vmul.f32 %v1247, %v1255
        %1258 = vrot.lane.b32.xlu0 %v737, 56
        %v1259 = vpop.permute.xlu0 %1258
        %v1262 = vsel %vm750, %v1256, 0
        %1264 = vmatprep.subr.mxu0 0.0
        %1265 = vmatpush1.msra.mxu0 %v1259
        %1266 = vmatprep.subr.mxu0 0.0
        %1267 = vmatpush1.msra.mxu0 0.0
        %1268 = vmatprep.subr.mxu0 0.0
        %1269 = vmatpush1.msra.mxu0 0.0
        %1270 = vmatprep.subr.mxu0 0.0
        %1271 = vmatpush1.msra.mxu0 0.0
        %1272 = vmatprep.subr.mxu0 0.0
        %1273 = vmatpush1.msra.mxu0 0.0
        %1274 = vmatprep.subr.mxu0 0.0
        %1275 = vmatpush1.msra.mxu0 0.0
        %1276 = vmatprep.subr.mxu0 0.0
        %1277 = vmatpush1.msra.mxu0 0.0
        %1278 = vmatprep.subr.mxu0 0.0
        %1279 = vmatpush1.msra.mxu0 0.0
        %1280 = vmatprep.subr.mxu0 0.0
        %1281 = vmatpush1.msra.mxu0 0.0
        %1282 = vmatprep.subr.mxu0 0.0
        %1283 = vmatpush1.msra.mxu0 0.0
        %1284 = vmatprep.subr.mxu0 0.0
        %1285 = vmatpush1.msra.mxu0 0.0
        %1286 = vmatprep.subr.mxu0 0.0
        %1287 = vmatpush1.msra.mxu0 0.0
        %1288 = vmatprep.subr.mxu0 0.0
        %1289 = vmatpush1.msra.mxu0 0.0
        %1290 = vmatprep.subr.mxu0 0.0
        %1291 = vmatpush1.msra.mxu0 0.0
        %1292 = vmatprep.subr.mxu0 0.0
        %1293 = vmatpush1.msra.mxu0 0.0
        %1294 = vmatprep.subr.mxu0 0.0
        %1295 = vmatpush1.msra.mxu0 0.0
        %1296 = vmatprep.subr.mxu0 0.0
        %1297 = vmatpush1.msra.mxu0 0.0
        %1298 = vmatprep.subr.mxu0 0.0
        %1299 = vmatpush1.msra.mxu0 0.0
        %1300 = vmatprep.subr.mxu0 0.0
        %1301 = vmatpush1.msra.mxu0 0.0
        %1302 = vmatprep.subr.mxu0 0.0
        %1303 = vmatpush1.msra.mxu0 0.0
        %1304 = vmatprep.subr.mxu0 0.0
        %1305 = vmatpush1.msra.mxu0 0.0
        %1306 = vmatprep.subr.mxu0 0.0
        %1307 = vmatpush1.msra.mxu0 0.0
        %1308 = vmatprep.subr.mxu0 0.0
        %1309 = vmatpush1.msra.mxu0 0.0
        %1310 = vmatprep.subr.mxu0 0.0
        %1311 = vmatpush1.msra.mxu0 0.0
        %1312 = vmatprep.subr.mxu0 0.0
        %1313 = vmatpush1.msra.mxu0 0.0
        %1314 = vmatprep.subr.mxu0 0.0
        %1315 = vmatpush1.msra.mxu0 0.0
        %1316 = vmatprep.subr.mxu0 0.0
        %1317 = vmatpush1.msra.mxu0 0.0
        %1318 = vmatprep.subr.mxu0 0.0
        %1319 = vmatpush1.msra.mxu0 0.0
        %1320 = vmatprep.subr.mxu0 0.0
        %1321 = vmatpush1.msra.mxu0 0.0
        %1322 = vmatprep.subr.mxu0 0.0
        %1323 = vmatpush1.msra.mxu0 0.0
        %1324 = vmatprep.subr.mxu0 0.0
        %1325 = vmatpush1.msra.mxu0 0.0
        %1326 = vmatprep.subr.mxu0 0.0
        %1327 = vmatpush1.msra.mxu0 0.0
        %1328 = vmatprep.mubr.f32.mxu0 0.0
        %1329 = vmatmul.mubr.f32.gmra.mrb[0].mxu0 %v1262
        %v1330 = vpop.f32.mrb[0].mxu0
        %v1331 = vadd.f32 0.0, %v1330
        %v1332 = vpop.f32.mrb[0].mxu0
        %1333 = vdwg.mxu0
        %1334 = vrot.lane.b32.xlu0 %v742, 56
        %v1335 = vpop.permute.xlu0 %1334
        %v1338 = vsel %vm750, %v1257, 0
        %1340 = vmatprep.subr.mxu0 0.0
        %1341 = vmatpush1.msra.mxu0 %v1335
        %1342 = vmatprep.subr.mxu0 0.0
        %1343 = vmatpush1.msra.mxu0 0.0
        %1344 = vmatprep.subr.mxu0 0.0
        %1345 = vmatpush1.msra.mxu0 0.0
        %1346 = vmatprep.subr.mxu0 0.0
        %1347 = vmatpush1.msra.mxu0 0.0
        %1348 = vmatprep.subr.mxu0 0.0
        %1349 = vmatpush1.msra.mxu0 0.0
        %1350 = vmatprep.subr.mxu0 0.0
        %1351 = vmatpush1.msra.mxu0 0.0
        %1352 = vmatprep.subr.mxu0 0.0
        %1353 = vmatpush1.msra.mxu0 0.0
        %1354 = vmatprep.subr.mxu0 0.0
        %1355 = vmatpush1.msra.mxu0 0.0
        %1356 = vmatprep.subr.mxu0 0.0
        %1357 = vmatpush1.msra.mxu0 0.0
        %1358 = vmatprep.subr.mxu0 0.0
        %1359 = vmatpush1.msra.mxu0 0.0
        %1360 = vmatprep.subr.mxu0 0.0
        %1361 = vmatpush1.msra.mxu0 0.0
        %1362 = vmatprep.subr.mxu0 0.0
        %1363 = vmatpush1.msra.mxu0 0.0
        %1364 = vmatprep.subr.mxu0 0.0
        %1365 = vmatpush1.msra.mxu0 0.0
        %1366 = vmatprep.subr.mxu0 0.0
        %1367 = vmatpush1.msra.mxu0 0.0
        %1368 = vmatprep.subr.mxu0 0.0
        %1369 = vmatpush1.msra.mxu0 0.0
        %1370 = vmatprep.subr.mxu0 0.0
        %1371 = vmatpush1.msra.mxu0 0.0
        %1372 = vmatprep.subr.mxu0 0.0
        %1373 = vmatpush1.msra.mxu0 0.0
        %1374 = vmatprep.subr.mxu0 0.0
        %1375 = vmatpush1.msra.mxu0 0.0
        %1376 = vmatprep.subr.mxu0 0.0
        %1377 = vmatpush1.msra.mxu0 0.0
        %1378 = vmatprep.subr.mxu0 0.0
        %1379 = vmatpush1.msra.mxu0 0.0
        %1380 = vmatprep.subr.mxu0 0.0
        %1381 = vmatpush1.msra.mxu0 0.0
        %1382 = vmatprep.subr.mxu0 0.0
        %1383 = vmatpush1.msra.mxu0 0.0
        %1384 = vmatprep.subr.mxu0 0.0
        %1385 = vmatpush1.msra.mxu0 0.0
        %1386 = vmatprep.subr.mxu0 0.0
        %1387 = vmatpush1.msra.mxu0 0.0
        %1388 = vmatprep.subr.mxu0 0.0
        %1389 = vmatpush1.msra.mxu0 0.0
        %1390 = vmatprep.subr.mxu0 0.0
        %1391 = vmatpush1.msra.mxu0 0.0
        %1392 = vmatprep.subr.mxu0 0.0
        %1393 = vmatpush1.msra.mxu0 0.0
        %1394 = vmatprep.subr.mxu0 0.0
        %1395 = vmatpush1.msra.mxu0 0.0
        %1396 = vmatprep.subr.mxu0 0.0
        %1397 = vmatpush1.msra.mxu0 0.0
        %1398 = vmatprep.subr.mxu0 0.0
        %1399 = vmatpush1.msra.mxu0 0.0
        %1400 = vmatprep.subr.mxu0 0.0
        %1401 = vmatpush1.msra.mxu0 0.0
        %1402 = vmatprep.subr.mxu0 0.0
        %1403 = vmatpush1.msra.mxu0 0.0
        %1404 = vmatprep.mubr.f32.mxu0 0.0
        %1405 = vmatmul.mubr.f32.gmra.mrb[0].mxu0 %v1338
        %v1406 = vpop.f32.mrb[0].mxu0
        %v1407 = vadd.f32 0.0, %v1406
        %v1408 = vpop.f32.mrb[0].mxu0
        %1409 = vdwg.mxu0
        %1412 = vrot.lane.b32.xlu0 %v1331, 8
        %v1413 = vpop.permute.xlu0 %1412
        %1414 = vrot.lane.b32.xlu0 %v1407, 8
        %v1415 = vpop.permute.xlu0 %1414
        %vm1418 = vcmask 130112
        %1419 = vst.msk [vmem:[#allocation3] sm:$0xff] %vm1418, %v1413
        %1420 = vst.msk [vmem:[#allocation3 + $0x8] sm:$0xff] %vm1418, %v1415
        %1421 = vrot.lane.b32.xlu0 %v745, 112
        %v1422 = vpop.permute.xlu0 %1421
        %1423 = vrot.lane.b32.xlu0 %v737, 80
        %v1424 = vpop.permute.xlu0 %1423
        %v1425 = vsel %vm750, %v1422, 0
        %v1427 = vsel %vm750, %v1424, 0
        %1429 = vmatprep.subr.mxu0 0.0
        %1430 = vmatpush1.xpose.msra.mxu0 %v1427
        %1431 = vmatprep.subr.mxu0 0.0
        %1432 = vmatpush1.xpose.msra.mxu0 0.0
        %1433 = vmatprep.subr.mxu0 0.0
        %1434 = vmatpush1.xpose.msra.mxu0 0.0
        %1435 = vmatprep.subr.mxu0 0.0
        %1436 = vmatpush1.xpose.msra.mxu0 0.0
        %1437 = vmatprep.subr.mxu0 0.0
        %1438 = vmatpush1.xpose.msra.mxu0 0.0
        %1439 = vmatprep.subr.mxu0 0.0
        %1440 = vmatpush1.xpose.msra.mxu0 0.0
        %1441 = vmatprep.subr.mxu0 0.0
        %1442 = vmatpush1.xpose.msra.mxu0 0.0
        %1443 = vmatprep.subr.mxu0 0.0
        %1444 = vmatpush1.xpose.msra.mxu0 0.0
        %1445 = vmatprep.subr.mxu0 0.0
        %1446 = vmatpush1.xpose.msra.mxu0 0.0
        %1447 = vmatprep.subr.mxu0 0.0
        %1448 = vmatpush1.xpose.msra.mxu0 0.0
        %1449 = vmatprep.subr.mxu0 0.0
        %1450 = vmatpush1.xpose.msra.mxu0 0.0
        %1451 = vmatprep.subr.mxu0 0.0
        %1452 = vmatpush1.xpose.msra.mxu0 0.0
        %1453 = vmatprep.subr.mxu0 0.0
        %1454 = vmatpush1.xpose.msra.mxu0 0.0
        %1455 = vmatprep.subr.mxu0 0.0
        %1456 = vmatpush1.xpose.msra.mxu0 0.0
        %1457 = vmatprep.subr.mxu0 0.0
        %1458 = vmatpush1.xpose.msra.mxu0 0.0
        %1459 = vmatprep.subr.mxu0 0.0
        %1460 = vmatpush1.xpose.msra.mxu0 0.0
        %1461 = vmatprep.subr.mxu0 0.0
        %1462 = vmatpush1.xpose.msra.mxu0 0.0
        %1463 = vmatprep.subr.mxu0 0.0
        %1464 = vmatpush1.xpose.msra.mxu0 0.0
        %1465 = vmatprep.subr.mxu0 0.0
        %1466 = vmatpush1.xpose.msra.mxu0 0.0
        %1467 = vmatprep.subr.mxu0 0.0
        %1468 = vmatpush1.xpose.msra.mxu0 0.0
        %1469 = vmatprep.subr.mxu0 0.0
        %1470 = vmatpush1.xpose.msra.mxu0 0.0
        %1471 = vmatprep.subr.mxu0 0.0
        %1472 = vmatpush1.xpose.msra.mxu0 0.0
        %1473 = vmatprep.subr.mxu0 0.0
        %1474 = vmatpush1.xpose.msra.mxu0 0.0
        %1475 = vmatprep.subr.mxu0 0.0
        %1476 = vmatpush1.xpose.msra.mxu0 0.0
        %1477 = vmatprep.subr.mxu0 0.0
        %1478 = vmatpush1.xpose.msra.mxu0 0.0
        %1479 = vmatprep.subr.mxu0 0.0
        %1480 = vmatpush1.xpose.msra.mxu0 0.0
        %1481 = vmatprep.subr.mxu0 0.0
        %1482 = vmatpush1.xpose.msra.mxu0 0.0
        %1483 = vmatprep.subr.mxu0 0.0
        %1484 = vmatpush1.xpose.msra.mxu0 0.0
        %1485 = vmatprep.subr.mxu0 0.0
        %1486 = vmatpush1.xpose.msra.mxu0 0.0
        %1487 = vmatprep.subr.mxu0 0.0
        %1488 = vmatpush1.xpose.msra.mxu0 0.0
        %1489 = vmatprep.subr.mxu0 0.0
        %1490 = vmatpush1.xpose.msra.mxu0 0.0
        %1491 = vmatprep.subr.mxu0 0.0
        %1492 = vmatpush1.xpose.msra.mxu0 0.0
        %1493 = vmatprep.mubr.f32.mxu0 0.0
        %1494 = vmatmul.mubr.f32.gmra.mrb[0].mxu0 %v1425
        %v1495 = vpop.f32.mrb[0].mxu0
        %v1496 = vadd.f32 0.0, %v1495
        %v1497 = vpop.f32.mrb[0].mxu0
        %1498 = vdwg.mxu0
        %1499 = vrot.lane.b32.xlu0 %v746, 112
        %v1500 = vpop.permute.xlu0 %1499
        %1501 = vrot.lane.b32.xlu0 %v742, 80
        %v1502 = vpop.permute.xlu0 %1501
        %v1503 = vsel %vm750, %v1500, 0
        %v1505 = vsel %vm750, %v1502, 0
        %1507 = vmatprep.subr.mxu0 0.0
        %1508 = vmatpush1.xpose.msra.mxu0 %v1505
        %1509 = vmatprep.subr.mxu0 0.0
        %1510 = vmatpush1.xpose.msra.mxu0 0.0
        %1511 = vmatprep.subr.mxu0 0.0
        %1512 = vmatpush1.xpose.msra.mxu0 0.0
        %1513 = vmatprep.subr.mxu0 0.0
        %1514 = vmatpush1.xpose.msra.mxu0 0.0
        %1515 = vmatprep.subr.mxu0 0.0
        %1516 = vmatpush1.xpose.msra.mxu0 0.0
        %1517 = vmatprep.subr.mxu0 0.0
        %1518 = vmatpush1.xpose.msra.mxu0 0.0
        %1519 = vmatprep.subr.mxu0 0.0
        %1520 = vmatpush1.xpose.msra.mxu0 0.0
        %1521 = vmatprep.subr.mxu0 0.0
        %1522 = vmatpush1.xpose.msra.mxu0 0.0
        %1523 = vmatprep.subr.mxu0 0.0
        %1524 = vmatpush1.xpose.msra.mxu0 0.0
        %1525 = vmatprep.subr.mxu0 0.0
        %1526 = vmatpush1.xpose.msra.mxu0 0.0
        %1527 = vmatprep.subr.mxu0 0.0
        %1528 = vmatpush1.xpose.msra.mxu0 0.0
        %1529 = vmatprep.subr.mxu0 0.0
        %1530 = vmatpush1.xpose.msra.mxu0 0.0
        %1531 = vmatprep.subr.mxu0 0.0
        %1532 = vmatpush1.xpose.msra.mxu0 0.0
        %1533 = vmatprep.subr.mxu0 0.0
        %1534 = vmatpush1.xpose.msra.mxu0 0.0
        %1535 = vmatprep.subr.mxu0 0.0
        %1536 = vmatpush1.xpose.msra.mxu0 0.0
        %1537 = vmatprep.subr.mxu0 0.0
        %1538 = vmatpush1.xpose.msra.mxu0 0.0
        %1539 = vmatprep.subr.mxu0 0.0
        %1540 = vmatpush1.xpose.msra.mxu0 0.0
        %1541 = vmatprep.subr.mxu0 0.0
        %1542 = vmatpush1.xpose.msra.mxu0 0.0
        %1543 = vmatprep.subr.mxu0 0.0
        %1544 = vmatpush1.xpose.msra.mxu0 0.0
        %1545 = vmatprep.subr.mxu0 0.0
        %1546 = vmatpush1.xpose.msra.mxu0 0.0
        %1547 = vmatprep.subr.mxu0 0.0
        %1548 = vmatpush1.xpose.msra.mxu0 0.0
        %1549 = vmatprep.subr.mxu0 0.0
        %1550 = vmatpush1.xpose.msra.mxu0 0.0
        %1551 = vmatprep.subr.mxu0 0.0
        %1552 = vmatpush1.xpose.msra.mxu0 0.0
        %1553 = vmatprep.subr.mxu0 0.0
        %1554 = vmatpush1.xpose.msra.mxu0 0.0
        %1555 = vmatprep.subr.mxu0 0.0
        %1556 = vmatpush1.xpose.msra.mxu0 0.0
        %1557 = vmatprep.subr.mxu0 0.0
        %1558 = vmatpush1.xpose.msra.mxu0 0.0
        %1559 = vmatprep.subr.mxu0 0.0
        %1560 = vmatpush1.xpose.msra.mxu0 0.0
        %1561 = vmatprep.subr.mxu0 0.0
        %1562 = vmatpush1.xpose.msra.mxu0 0.0
        %1563 = vmatprep.subr.mxu0 0.0
        %1564 = vmatpush1.xpose.msra.mxu0 0.0
        %1565 = vmatprep.subr.mxu0 0.0
        %1566 = vmatpush1.xpose.msra.mxu0 0.0
        %1567 = vmatprep.subr.mxu0 0.0
        %1568 = vmatpush1.xpose.msra.mxu0 0.0
        %1569 = vmatprep.subr.mxu0 0.0
        %1570 = vmatpush1.xpose.msra.mxu0 0.0
        %1571 = vmatprep.mubr.f32.mxu0 0.0
        %1572 = vmatmul.mubr.f32.gmra.mrb[0].mxu0 %v1503
        %v1573 = vpop.f32.mrb[0].mxu0
        %v1574 = vadd.f32 0.0, %v1573
        %v1575 = vpop.f32.mrb[0].mxu0
        %1576 = vdwg.mxu0
        %v1577 = vsel %vm750, %v1496, -inf
        %1578 = vmax.xlane.f32.xlu0 %v1577
        %v1579 = vpop.xlane.xlu0 %1578
        %v1580 = vsel %vm750, %v1574, -inf
        %1581 = vmax.xlane.f32.xlu0 %v1580
        %v1582 = vpop.xlane.xlu0 %1581
        %v1583 = vsub.f32 %v1496, %v1579
        %v1584 = vsub.f32 %v1574, %v1582
        %v1585 = vmul.f32 %v1583, 1.442695
        %v1586 = vpow.pop %v1585
        %v1587 = vmul.f32 %v1584, 1.442695
        %v1588 = vpow.pop %v1587
        %v1589 = vsel %vm750, %v1586, 0.0
        %1590 = vadd.xlane.f32.xlu0 %v1589
        %v1591 = vpop.xlane.xlu0 %1590
        %v1592 = vsel %vm750, %v1588, 0.0
        %1593 = vadd.xlane.f32.xlu0 %v1592
        %v1594 = vpop.xlane.xlu0 %1593
        %v1595 = vrcp.pop %v1591
        %v1596 = vrcp.pop %v1594
        %v1597 = vmul.f32 %v1586, %v1595
        %v1598 = vmul.f32 %v1588, %v1596
        %1599 = vrot.lane.b32.xlu0 %v737, 48
        %v1600 = vpop.permute.xlu0 %1599
        %v1603 = vsel %vm750, %v1597, 0
        %1605 = vmatprep.subr.mxu0 0.0
        %1606 = vmatpush1.msra.mxu0 %v1600
        %1607 = vmatprep.subr.mxu0 0.0
        %1608 = vmatpush1.msra.mxu0 0.0
        %1609 = vmatprep.subr.mxu0 0.0
        %1610 = vmatpush1.msra.mxu0 0.0
        %1611 = vmatprep.subr.mxu0 0.0
        %1612 = vmatpush1.msra.mxu0 0.0
        %1613 = vmatprep.subr.mxu0 0.0
        %1614 = vmatpush1.msra.mxu0 0.0
        %1615 = vmatprep.subr.mxu0 0.0
        %1616 = vmatpush1.msra.mxu0 0.0
        %1617 = vmatprep.subr.mxu0 0.0
        %1618 = vmatpush1.msra.mxu0 0.0
        %1619 = vmatprep.subr.mxu0 0.0
        %1620 = vmatpush1.msra.mxu0 0.0
        %1621 = vmatprep.subr.mxu0 0.0
        %1622 = vmatpush1.msra.mxu0 0.0
        %1623 = vmatprep.subr.mxu0 0.0
        %1624 = vmatpush1.msra.mxu0 0.0
        %1625 = vmatprep.subr.mxu0 0.0
        %1626 = vmatpush1.msra.mxu0 0.0
        %1627 = vmatprep.subr.mxu0 0.0
        %1628 = vmatpush1.msra.mxu0 0.0
        %1629 = vmatprep.subr.mxu0 0.0
        %1630 = vmatpush1.msra.mxu0 0.0
        %1631 = vmatprep.subr.mxu0 0.0
        %1632 = vmatpush1.msra.mxu0 0.0
        %1633 = vmatprep.subr.mxu0 0.0
        %1634 = vmatpush1.msra.mxu0 0.0
        %1635 = vmatprep.subr.mxu0 0.0
        %1636 = vmatpush1.msra.mxu0 0.0
        %1637 = vmatprep.subr.mxu0 0.0
        %1638 = vmatpush1.msra.mxu0 0.0
        %1639 = vmatprep.subr.mxu0 0.0
        %1640 = vmatpush1.msra.mxu0 0.0
        %1641 = vmatprep.subr.mxu0 0.0
        %1642 = vmatpush1.msra.mxu0 0.0
        %1643 = vmatprep.subr.mxu0 0.0
        %1644 = vmatpush1.msra.mxu0 0.0
        %1645 = vmatprep.subr.mxu0 0.0
        %1646 = vmatpush1.msra.mxu0 0.0
        %1647 = vmatprep.subr.mxu0 0.0
        %1648 = vmatpush1.msra.mxu0 0.0
        %1649 = vmatprep.subr.mxu0 0.0
        %1650 = vmatpush1.msra.mxu0 0.0
        %1651 = vmatprep.subr.mxu0 0.0
        %1652 = vmatpush1.msra.mxu0 0.0
        %1653 = vmatprep.subr.mxu0 0.0
        %1654 = vmatpush1.msra.mxu0 0.0
        %1655 = vmatprep.subr.mxu0 0.0
        %1656 = vmatpush1.msra.mxu0 0.0
        %1657 = vmatprep.subr.mxu0 0.0
        %1658 = vmatpush1.msra.mxu0 0.0
        %1659 = vmatprep.subr.mxu0 0.0
        %1660 = vmatpush1.msra.mxu0 0.0
        %1661 = vmatprep.subr.mxu0 0.0
        %1662 = vmatpush1.msra.mxu0 0.0
        %1663 = vmatprep.subr.mxu0 0.0
        %1664 = vmatpush1.msra.mxu0 0.0
        %1665 = vmatprep.subr.mxu0 0.0
        %1666 = vmatpush1.msra.mxu0 0.0
        %1667 = vmatprep.subr.mxu0 0.0
        %1668 = vmatpush1.msra.mxu0 0.0
        %1669 = vmatprep.mubr.f32.mxu0 0.0
        %1670 = vmatmul.mubr.f32.gmra.mrb[0].mxu0 %v1603
        %v1671 = vpop.f32.mrb[0].mxu0
        %v1672 = vadd.f32 0.0, %v1671
        %v1673 = vpop.f32.mrb[0].mxu0
        %1674 = vdwg.mxu0
        %1675 = vrot.lane.b32.xlu0 %v742, 48
        %v1676 = vpop.permute.xlu0 %1675
        %v1679 = vsel %vm750, %v1598, 0
        %1681 = vmatprep.subr.mxu0 0.0
        %1682 = vmatpush1.msra.mxu0 %v1676
        %1683 = vmatprep.subr.mxu0 0.0
        %1684 = vmatpush1.msra.mxu0 0.0
        %1685 = vmatprep.subr.mxu0 0.0
        %1686 = vmatpush1.msra.mxu0 0.0
        %1687 = vmatprep.subr.mxu0 0.0
        %1688 = vmatpush1.msra.mxu0 0.0
        %1689 = vmatprep.subr.mxu0 0.0
        %1690 = vmatpush1.msra.mxu0 0.0
        %1691 = vmatprep.subr.mxu0 0.0
        %1692 = vmatpush1.msra.mxu0 0.0
        %1693 = vmatprep.subr.mxu0 0.0
        %1694 = vmatpush1.msra.mxu0 0.0
        %1695 = vmatprep.subr.mxu0 0.0
        %1696 = vmatpush1.msra.mxu0 0.0
        %1697 = vmatprep.subr.mxu0 0.0
        %1698 = vmatpush1.msra.mxu0 0.0
        %1699 = vmatprep.subr.mxu0 0.0
        %1700 = vmatpush1.msra.mxu0 0.0
        %1701 = vmatprep.subr.mxu0 0.0
        %1702 = vmatpush1.msra.mxu0 0.0
        %1703 = vmatprep.subr.mxu0 0.0
        %1704 = vmatpush1.msra.mxu0 0.0
        %1705 = vmatprep.subr.mxu0 0.0
        %1706 = vmatpush1.msra.mxu0 0.0
        %1707 = vmatprep.subr.mxu0 0.0
        %1708 = vmatpush1.msra.mxu0 0.0
        %1709 = vmatprep.subr.mxu0 0.0
        %1710 = vmatpush1.msra.mxu0 0.0
        %1711 = vmatprep.subr.mxu0 0.0
        %1712 = vmatpush1.msra.mxu0 0.0
        %1713 = vmatprep.subr.mxu0 0.0
        %1714 = vmatpush1.msra.mxu0 0.0
        %1715 = vmatprep.subr.mxu0 0.0
        %1716 = vmatpush1.msra.mxu0 0.0
        %1717 = vmatprep.subr.mxu0 0.0
        %1718 = vmatpush1.msra.mxu0 0.0
        %1719 = vmatprep.subr.mxu0 0.0
        %1720 = vmatpush1.msra.mxu0 0.0
        %1721 = vmatprep.subr.mxu0 0.0
        %1722 = vmatpush1.msra.mxu0 0.0
        %1723 = vmatprep.subr.mxu0 0.0
        %1724 = vmatpush1.msra.mxu0 0.0
        %1725 = vmatprep.subr.mxu0 0.0
        %1726 = vmatpush1.msra.mxu0 0.0
        %1727 = vmatprep.subr.mxu0 0.0
        %1728 = vmatpush1.msra.mxu0 0.0
        %1729 = vmatprep.subr.mxu0 0.0
        %1730 = vmatpush1.msra.mxu0 0.0
        %1731 = vmatprep.subr.mxu0 0.0
        %1732 = vmatpush1.msra.mxu0 0.0
        %1733 = vmatprep.subr.mxu0 0.0
        %1734 = vmatpush1.msra.mxu0 0.0
        %1735 = vmatprep.subr.mxu0 0.0
        %1736 = vmatpush1.msra.mxu0 0.0
        %1737 = vmatprep.subr.mxu0 0.0
        %1738 = vmatpush1.msra.mxu0 0.0
        %1739 = vmatprep.subr.mxu0 0.0
        %1740 = vmatpush1.msra.mxu0 0.0
        %1741 = vmatprep.subr.mxu0 0.0
        %1742 = vmatpush1.msra.mxu0 0.0
        %1743 = vmatprep.subr.mxu0 0.0
        %1744 = vmatpush1.msra.mxu0 0.0
        %1745 = vmatprep.mubr.f32.mxu0 0.0
        %1746 = vmatmul.mubr.f32.gmra.mrb[0].mxu0 %v1679
        %v1747 = vpop.f32.mrb[0].mxu0
        %v1748 = vadd.f32 0.0, %v1747
        %v1749 = vpop.f32.mrb[0].mxu0
        %1750 = vdwg.mxu0
        %1753 = vrot.lane.b32.xlu0 %v1672, 16
        %v1754 = vpop.permute.xlu0 %1753
        %1755 = vrot.lane.b32.xlu0 %v1748, 16
        %v1756 = vpop.permute.xlu0 %1755
        %vm1759 = vcmask 195712
        %1760 = vst.msk [vmem:[#allocation3] sm:$0xff] %vm1759, %v1754
        %1761 = vst.msk [vmem:[#allocation3 + $0x8] sm:$0xff] %vm1759, %v1756
        %1762 = vrot.lane.b32.xlu0 %v745, 104
        %v1763 = vpop.permute.xlu0 %1762
        %1764 = vrot.lane.b32.xlu0 %v737, 72
        %v1765 = vpop.permute.xlu0 %1764
        %v1766 = vsel %vm750, %v1763, 0
        %v1768 = vsel %vm750, %v1765, 0
        %1770 = vmatprep.subr.mxu0 0.0
        %1771 = vmatpush1.xpose.msra.mxu0 %v1768
        %1772 = vmatprep.subr.mxu0 0.0
        %1773 = vmatpush1.xpose.msra.mxu0 0.0
        %1774 = vmatprep.subr.mxu0 0.0
        %1775 = vmatpush1.xpose.msra.mxu0 0.0
        %1776 = vmatprep.subr.mxu0 0.0
        %1777 = vmatpush1.xpose.msra.mxu0 0.0
        %1778 = vmatprep.subr.mxu0 0.0
        %1779 = vmatpush1.xpose.msra.mxu0 0.0
        %1780 = vmatprep.subr.mxu0 0.0
        %1781 = vmatpush1.xpose.msra.mxu0 0.0
        %1782 = vmatprep.subr.mxu0 0.0
        %1783 = vmatpush1.xpose.msra.mxu0 0.0
        %1784 = vmatprep.subr.mxu0 0.0
        %1785 = vmatpush1.xpose.msra.mxu0 0.0
        %1786 = vmatprep.subr.mxu0 0.0
        %1787 = vmatpush1.xpose.msra.mxu0 0.0
        %1788 = vmatprep.subr.mxu0 0.0
        %1789 = vmatpush1.xpose.msra.mxu0 0.0
        %1790 = vmatprep.subr.mxu0 0.0
        %1791 = vmatpush1.xpose.msra.mxu0 0.0
        %1792 = vmatprep.subr.mxu0 0.0
        %1793 = vmatpush1.xpose.msra.mxu0 0.0
        %1794 = vmatprep.subr.mxu0 0.0
        %1795 = vmatpush1.xpose.msra.mxu0 0.0
        %1796 = vmatprep.subr.mxu0 0.0
        %1797 = vmatpush1.xpose.msra.mxu0 0.0
        %1798 = vmatprep.subr.mxu0 0.0
        %1799 = vmatpush1.xpose.msra.mxu0 0.0
        %1800 = vmatprep.subr.mxu0 0.0
        %1801 = vmatpush1.xpose.msra.mxu0 0.0
        %1802 = vmatprep.subr.mxu0 0.0
        %1803 = vmatpush1.xpose.msra.mxu0 0.0
        %1804 = vmatprep.subr.mxu0 0.0
        %1805 = vmatpush1.xpose.msra.mxu0 0.0
        %1806 = vmatprep.subr.mxu0 0.0
        %1807 = vmatpush1.xpose.msra.mxu0 0.0
        %1808 = vmatprep.subr.mxu0 0.0
        %1809 = vmatpush1.xpose.msra.mxu0 0.0
        %1810 = vmatprep.subr.mxu0 0.0
        %1811 = vmatpush1.xpose.msra.mxu0 0.0
        %1812 = vmatprep.subr.mxu0 0.0
        %1813 = vmatpush1.xpose.msra.mxu0 0.0
        %1814 = vmatprep.subr.mxu0 0.0
        %1815 = vmatpush1.xpose.msra.mxu0 0.0
        %1816 = vmatprep.subr.mxu0 0.0
        %1817 = vmatpush1.xpose.msra.mxu0 0.0
        %1818 = vmatprep.subr.mxu0 0.0
        %1819 = vmatpush1.xpose.msra.mxu0 0.0
        %1820 = vmatprep.subr.mxu0 0.0
        %1821 = vmatpush1.xpose.msra.mxu0 0.0
        %1822 = vmatprep.subr.mxu0 0.0
        %1823 = vmatpush1.xpose.msra.mxu0 0.0
        %1824 = vmatprep.subr.mxu0 0.0
        %1825 = vmatpush1.xpose.msra.mxu0 0.0
        %1826 = vmatprep.subr.mxu0 0.0
        %1827 = vmatpush1.xpose.msra.mxu0 0.0
        %1828 = vmatprep.subr.mxu0 0.0
        %1829 = vmatpush1.xpose.msra.mxu0 0.0
        %1830 = vmatprep.subr.mxu0 0.0
        %1831 = vmatpush1.xpose.msra.mxu0 0.0
        %1832 = vmatprep.subr.mxu0 0.0
        %1833 = vmatpush1.xpose.msra.mxu0 0.0
        %1834 = vmatprep.mubr.f32.mxu0 0.0
        %1835 = vmatmul.mubr.f32.gmra.mrb[0].mxu0 %v1766
        %v1836 = vpop.f32.mrb[0].mxu0
        %v1837 = vadd.f32 0.0, %v1836
        %v1838 = vpop.f32.mrb[0].mxu0
        %1839 = vdwg.mxu0
        %1840 = vrot.lane.b32.xlu0 %v746, 104
        %v1841 = vpop.permute.xlu0 %1840
        %1842 = vrot.lane.b32.xlu0 %v742, 72
        %v1843 = vpop.permute.xlu0 %1842
        %v1844 = vsel %vm750, %v1841, 0
        %v1846 = vsel %vm750, %v1843, 0
        %1848 = vmatprep.subr.mxu0 0.0
        %1849 = vmatpush1.xpose.msra.mxu0 %v1846
        %1850 = vmatprep.subr.mxu0 0.0
        %1851 = vmatpush1.xpose.msra.mxu0 0.0
        %1852 = vmatprep.subr.mxu0 0.0
        %1853 = vmatpush1.xpose.msra.mxu0 0.0
        %1854 = vmatprep.subr.mxu0 0.0
        %1855 = vmatpush1.xpose.msra.mxu0 0.0
        %1856 = vmatprep.subr.mxu0 0.0
        %1857 = vmatpush1.xpose.msra.mxu0 0.0
        %1858 = vmatprep.subr.mxu0 0.0
        %1859 = vmatpush1.xpose.msra.mxu0 0.0
        %1860 = vmatprep.subr.mxu0 0.0
        %1861 = vmatpush1.xpose.msra.mxu0 0.0
        %1862 = vmatprep.subr.mxu0 0.0
        %1863 = vmatpush1.xpose.msra.mxu0 0.0
        %1864 = vmatprep.subr.mxu0 0.0
        %1865 = vmatpush1.xpose.msra.mxu0 0.0
        %1866 = vmatprep.subr.mxu0 0.0
        %1867 = vmatpush1.xpose.msra.mxu0 0.0
        %1868 = vmatprep.subr.mxu0 0.0
        %1869 = vmatpush1.xpose.msra.mxu0 0.0
        %1870 = vmatprep.subr.mxu0 0.0
        %1871 = vmatpush1.xpose.msra.mxu0 0.0
        %1872 = vmatprep.subr.mxu0 0.0
        %1873 = vmatpush1.xpose.msra.mxu0 0.0
        %1874 = vmatprep.subr.mxu0 0.0
        %1875 = vmatpush1.xpose.msra.mxu0 0.0
        %1876 = vmatprep.subr.mxu0 0.0
        %1877 = vmatpush1.xpose.msra.mxu0 0.0
        %1878 = vmatprep.subr.mxu0 0.0
        %1879 = vmatpush1.xpose.msra.mxu0 0.0
        %1880 = vmatprep.subr.mxu0 0.0
        %1881 = vmatpush1.xpose.msra.mxu0 0.0
        %1882 = vmatprep.subr.mxu0 0.0
        %1883 = vmatpush1.xpose.msra.mxu0 0.0
        %1884 = vmatprep.subr.mxu0 0.0
        %1885 = vmatpush1.xpose.msra.mxu0 0.0
        %1886 = vmatprep.subr.mxu0 0.0
        %1887 = vmatpush1.xpose.msra.mxu0 0.0
        %1888 = vmatprep.subr.mxu0 0.0
        %1889 = vmatpush1.xpose.msra.mxu0 0.0
        %1890 = vmatprep.subr.mxu0 0.0
        %1891 = vmatpush1.xpose.msra.mxu0 0.0
        %1892 = vmatprep.subr.mxu0 0.0
        %1893 = vmatpush1.xpose.msra.mxu0 0.0
        %1894 = vmatprep.subr.mxu0 0.0
        %1895 = vmatpush1.xpose.msra.mxu0 0.0
        %1896 = vmatprep.subr.mxu0 0.0
        %1897 = vmatpush1.xpose.msra.mxu0 0.0
        %1898 = vmatprep.subr.mxu0 0.0
        %1899 = vmatpush1.xpose.msra.mxu0 0.0
        %1900 = vmatprep.subr.mxu0 0.0
        %1901 = vmatpush1.xpose.msra.mxu0 0.0
        %1902 = vmatprep.subr.mxu0 0.0
        %1903 = vmatpush1.xpose.msra.mxu0 0.0
        %1904 = vmatprep.subr.mxu0 0.0
        %1905 = vmatpush1.xpose.msra.mxu0 0.0
        %1906 = vmatprep.subr.mxu0 0.0
        %1907 = vmatpush1.xpose.msra.mxu0 0.0
        %1908 = vmatprep.subr.mxu0 0.0
        %1909 = vmatpush1.xpose.msra.mxu0 0.0
        %1910 = vmatprep.subr.mxu0 0.0
        %1911 = vmatpush1.xpose.msra.mxu0 0.0
        %1912 = vmatprep.mubr.f32.mxu0 0.0
        %1913 = vmatmul.mubr.f32.gmra.mrb[0].mxu0 %v1844
        %v1914 = vpop.f32.mrb[0].mxu0
        %v1915 = vadd.f32 0.0, %v1914
        %v1916 = vpop.f32.mrb[0].mxu0
        %1917 = vdwg.mxu0
        %v1918 = vsel %vm750, %v1837, -inf
        %1919 = vmax.xlane.f32.xlu0 %v1918
        %v1920 = vpop.xlane.xlu0 %1919
        %v1921 = vsel %vm750, %v1915, -inf
        %1922 = vmax.xlane.f32.xlu0 %v1921
        %v1923 = vpop.xlane.xlu0 %1922
        %v1924 = vsub.f32 %v1837, %v1920
        %v1925 = vsub.f32 %v1915, %v1923
        %v1926 = vmul.f32 %v1924, 1.442695
        %v1927 = vpow.pop %v1926
        %v1928 = vmul.f32 %v1925, 1.442695
        %v1929 = vpow.pop %v1928
        %v1930 = vsel %vm750, %v1927, 0.0
        %1931 = vadd.xlane.f32.xlu0 %v1930
        %v1932 = vpop.xlane.xlu0 %1931
        %v1933 = vsel %vm750, %v1929, 0.0
        %1934 = vadd.xlane.f32.xlu0 %v1933
        %v1935 = vpop.xlane.xlu0 %1934
        %v1936 = vrcp.pop %v1932
        %v1937 = vrcp.pop %v1935
        %v1938 = vmul.f32 %v1927, %v1936
        %v1939 = vmul.f32 %v1929, %v1937
        %1940 = vrot.lane.b32.xlu0 %v737, 40
        %v1941 = vpop.permute.xlu0 %1940
        %v1944 = vsel %vm750, %v1938, 0
        %1946 = vmatprep.subr.mxu0 0.0
        %1947 = vmatpush1.msra.mxu0 %v1941
        %1948 = vmatprep.subr.mxu0 0.0
        %1949 = vmatpush1.msra.mxu0 0.0
        %1950 = vmatprep.subr.mxu0 0.0
        %1951 = vmatpush1.msra.mxu0 0.0
        %1952 = vmatprep.subr.mxu0 0.0
        %1953 = vmatpush1.msra.mxu0 0.0
        %1954 = vmatprep.subr.mxu0 0.0
        %1955 = vmatpush1.msra.mxu0 0.0
        %1956 = vmatprep.subr.mxu0 0.0
        %1957 = vmatpush1.msra.mxu0 0.0
        %1958 = vmatprep.subr.mxu0 0.0
        %1959 = vmatpush1.msra.mxu0 0.0
        %1960 = vmatprep.subr.mxu0 0.0
        %1961 = vmatpush1.msra.mxu0 0.0
        %1962 = vmatprep.subr.mxu0 0.0
        %1963 = vmatpush1.msra.mxu0 0.0
        %1964 = vmatprep.subr.mxu0 0.0
        %1965 = vmatpush1.msra.mxu0 0.0
        %1966 = vmatprep.subr.mxu0 0.0
        %1967 = vmatpush1.msra.mxu0 0.0
        %1968 = vmatprep.subr.mxu0 0.0
        %1969 = vmatpush1.msra.mxu0 0.0
        %1970 = vmatprep.subr.mxu0 0.0
        %1971 = vmatpush1.msra.mxu0 0.0
        %1972 = vmatprep.subr.mxu0 0.0
        %1973 = vmatpush1.msra.mxu0 0.0
        %1974 = vmatprep.subr.mxu0 0.0
        %1975 = vmatpush1.msra.mxu0 0.0
        %1976 = vmatprep.subr.mxu0 0.0
        %1977 = vmatpush1.msra.mxu0 0.0
        %1978 = vmatprep.subr.mxu0 0.0
        %1979 = vmatpush1.msra.mxu0 0.0
        %1980 = vmatprep.subr.mxu0 0.0
        %1981 = vmatpush1.msra.mxu0 0.0
        %1982 = vmatprep.subr.mxu0 0.0
        %1983 = vmatpush1.msra.mxu0 0.0
        %1984 = vmatprep.subr.mxu0 0.0
        %1985 = vmatpush1.msra.mxu0 0.0
        %1986 = vmatprep.subr.mxu0 0.0
        %1987 = vmatpush1.msra.mxu0 0.0
        %1988 = vmatprep.subr.mxu0 0.0
        %1989 = vmatpush1.msra.mxu0 0.0
        %1990 = vmatprep.subr.mxu0 0.0
        %1991 = vmatpush1.msra.mxu0 0.0
        %1992 = vmatprep.subr.mxu0 0.0
        %1993 = vmatpush1.msra.mxu0 0.0
        %1994 = vmatprep.subr.mxu0 0.0
        %1995 = vmatpush1.msra.mxu0 0.0
        %1996 = vmatprep.subr.mxu0 0.0
        %1997 = vmatpush1.msra.mxu0 0.0
        %1998 = vmatprep.subr.mxu0 0.0
        %1999 = vmatpush1.msra.mxu0 0.0
        %2000 = vmatprep.subr.mxu0 0.0
        %2001 = vmatpush1.msra.mxu0 0.0
        %2002 = vmatprep.subr.mxu0 0.0
        %2003 = vmatpush1.msra.mxu0 0.0
        %2004 = vmatprep.subr.mxu0 0.0
        %2005 = vmatpush1.msra.mxu0 0.0
        %2006 = vmatprep.subr.mxu0 0.0
        %2007 = vmatpush1.msra.mxu0 0.0
        %2008 = vmatprep.subr.mxu0 0.0
        %2009 = vmatpush1.msra.mxu0 0.0
        %2010 = vmatprep.mubr.f32.mxu0 0.0
        %2011 = vmatmul.mubr.f32.gmra.mrb[0].mxu0 %v1944
        %v2012 = vpop.f32.mrb[0].mxu0
        %v2013 = vadd.f32 0.0, %v2012
        %v2014 = vpop.f32.mrb[0].mxu0
        %2015 = vdwg.mxu0
        %2016 = vrot.lane.b32.xlu0 %v742, 40
        %v2017 = vpop.permute.xlu0 %2016
        %v2020 = vsel %vm750, %v1939, 0
        %2022 = vmatprep.subr.mxu0 0.0
        %2023 = vmatpush1.msra.mxu0 %v2017
        %2024 = vmatprep.subr.mxu0 0.0
        %2025 = vmatpush1.msra.mxu0 0.0
        %2026 = vmatprep.subr.mxu0 0.0
        %2027 = vmatpush1.msra.mxu0 0.0
        %2028 = vmatprep.subr.mxu0 0.0
        %2029 = vmatpush1.msra.mxu0 0.0
        %2030 = vmatprep.subr.mxu0 0.0
        %2031 = vmatpush1.msra.mxu0 0.0
        %2032 = vmatprep.subr.mxu0 0.0
        %2033 = vmatpush1.msra.mxu0 0.0
        %2034 = vmatprep.subr.mxu0 0.0
        %2035 = vmatpush1.msra.mxu0 0.0
        %2036 = vmatprep.subr.mxu0 0.0
        %2037 = vmatpush1.msra.mxu0 0.0
        %2038 = vmatprep.subr.mxu0 0.0
        %2039 = vmatpush1.msra.mxu0 0.0
        %2040 = vmatprep.subr.mxu0 0.0
        %2041 = vmatpush1.msra.mxu0 0.0
        %2042 = vmatprep.subr.mxu0 0.0
        %2043 = vmatpush1.msra.mxu0 0.0
        %2044 = vmatprep.subr.mxu0 0.0
        %2045 = vmatpush1.msra.mxu0 0.0
        %2046 = vmatprep.subr.mxu0 0.0
        %2047 = vmatpush1.msra.mxu0 0.0
        %2048 = vmatprep.subr.mxu0 0.0
        %2049 = vmatpush1.msra.mxu0 0.0
        %2050 = vmatprep.subr.mxu0 0.0
        %2051 = vmatpush1.msra.mxu0 0.0
        %2052 = vmatprep.subr.mxu0 0.0
        %2053 = vmatpush1.msra.mxu0 0.0
        %2054 = vmatprep.subr.mxu0 0.0
        %2055 = vmatpush1.msra.mxu0 0.0
        %2056 = vmatprep.subr.mxu0 0.0
        %2057 = vmatpush1.msra.mxu0 0.0
        %2058 = vmatprep.subr.mxu0 0.0
        %2059 = vmatpush1.msra.mxu0 0.0
        %2060 = vmatprep.subr.mxu0 0.0
        %2061 = vmatpush1.msra.mxu0 0.0
        %2062 = vmatprep.subr.mxu0 0.0
        %2063 = vmatpush1.msra.mxu0 0.0
        %2064 = vmatprep.subr.mxu0 0.0
        %2065 = vmatpush1.msra.mxu0 0.0
        %2066 = vmatprep.subr.mxu0 0.0
        %2067 = vmatpush1.msra.mxu0 0.0
        %2068 = vmatprep.subr.mxu0 0.0
        %2069 = vmatpush1.msra.mxu0 0.0
        %2070 = vmatprep.subr.mxu0 0.0
        %2071 = vmatpush1.msra.mxu0 0.0
        %2072 = vmatprep.subr.mxu0 0.0
        %2073 = vmatpush1.msra.mxu0 0.0
        %2074 = vmatprep.subr.mxu0 0.0
        %2075 = vmatpush1.msra.mxu0 0.0
        %2076 = vmatprep.subr.mxu0 0.0
        %2077 = vmatpush1.msra.mxu0 0.0
        %2078 = vmatprep.subr.mxu0 0.0
        %2079 = vmatpush1.msra.mxu0 0.0
        %2080 = vmatprep.subr.mxu0 0.0
        %2081 = vmatpush1.msra.mxu0 0.0
        %2082 = vmatprep.subr.mxu0 0.0
        %2083 = vmatpush1.msra.mxu0 0.0
        %2084 = vmatprep.subr.mxu0 0.0
        %2085 = vmatpush1.msra.mxu0 0.0
        %2086 = vmatprep.mubr.f32.mxu0 0.0
        %2087 = vmatmul.mubr.f32.gmra.mrb[0].mxu0 %v2020
        %v2088 = vpop.f32.mrb[0].mxu0
        %v2089 = vadd.f32 0.0, %v2088
        %v2090 = vpop.f32.mrb[0].mxu0
        %2091 = vdwg.mxu0
        %2094 = vrot.lane.b32.xlu0 %v2013, 24
        %v2095 = vpop.permute.xlu0 %2094
        %2096 = vrot.lane.b32.xlu0 %v2089, 24
        %v2097 = vpop.permute.xlu0 %2096
        %vm2100 = vcmask 261312
        %2101 = vst.msk [vmem:[#allocation3] sm:$0xff] %vm2100, %v2095
        %2102 = vst.msk [vmem:[#allocation3 + $0x8] sm:$0xff] %vm2100, %v2097
        %v2103 = vld [vmem:[#allocation3] sm:$0xff]
        %v2104 = vld [vmem:[#allocation3 + $0x8] sm:$0xff]
        %v2105 = vld [vmem:[%s608] sm:$0xff]
        %v2106 = vld [vmem:[%s608 + $0x8] sm:$0xff]
        %v2107 = vld [vmem:[%s608 + $0x10] sm:$0xff]
        %v2108 = vld [vmem:[%s608 + $0x18] sm:$0xff]
        %v2109 = vld [vmem:[%s611] sm:$0x1]
        %v2111 = vlaneseq
        %v2112 = vshrl.u32 %v2111, 7
        %v2113 = vsub.s32 0, %v2112
        %v2114 = vrot.slane %v2109, %v2113
        %v2117 = vsel %vm663, %v2103, 0
        %v2120 = vsel %vm663, %v2104, 0
        %2122 = vmatprep.subr.mxu0 0.0
        %2123 = vmatpush1.msra.mxu0 %v2105
        %2124 = vmatprep.subr.mxu0 0.0
        %2125 = vmatpush1.msra.mxu0 %v2106
        %2126 = vmatprep.subr.mxu0 0.0
        %2127 = vmatpush1.msra.mxu0 %v2107
        %2128 = vmatprep.subr.mxu0 0.0
        %2129 = vmatpush1.msra.mxu0 %v2108
        %2130 = vmatprep.subr.mxu0 0.0
        %2131 = vmatpush1.msra.mxu0 0.0
        %2132 = vmatprep.subr.mxu0 0.0
        %2133 = vmatpush1.msra.mxu0 0.0
        %2134 = vmatprep.subr.mxu0 0.0
        %2135 = vmatpush1.msra.mxu0 0.0
        %2136 = vmatprep.subr.mxu0 0.0
        %2137 = vmatpush1.msra.mxu0 0.0
        %2138 = vmatprep.subr.mxu0 0.0
        %2139 = vmatpush1.msra.mxu0 0.0
        %2140 = vmatprep.subr.mxu0 0.0
        %2141 = vmatpush1.msra.mxu0 0.0
        %2142 = vmatprep.subr.mxu0 0.0
        %2143 = vmatpush1.msra.mxu0 0.0
        %2144 = vmatprep.subr.mxu0 0.0
        %2145 = vmatpush1.msra.mxu0 0.0
        %2146 = vmatprep.subr.mxu0 0.0
        %2147 = vmatpush1.msra.mxu0 0.0
        %2148 = vmatprep.subr.mxu0 0.0
        %2149 = vmatpush1.msra.mxu0 0.0
        %2150 = vmatprep.subr.mxu0 0.0
        %2151 = vmatpush1.msra.mxu0 0.0
        %2152 = vmatprep.subr.mxu0 0.0
        %2153 = vmatpush1.msra.mxu0 0.0
        %2154 = vmatprep.subr.mxu0 0.0
        %2155 = vmatpush1.msra.mxu0 0.0
        %2156 = vmatprep.subr.mxu0 0.0
        %2157 = vmatpush1.msra.mxu0 0.0
        %2158 = vmatprep.subr.mxu0 0.0
        %2159 = vmatpush1.msra.mxu0 0.0
        %2160 = vmatprep.subr.mxu0 0.0
        %2161 = vmatpush1.msra.mxu0 0.0
        %2162 = vmatprep.subr.mxu0 0.0
        %2163 = vmatpush1.msra.mxu0 0.0
        %2164 = vmatprep.subr.mxu0 0.0
        %2165 = vmatpush1.msra.mxu0 0.0
        %2166 = vmatprep.subr.mxu0 0.0
        %2167 = vmatpush1.msra.mxu0 0.0
        %2168 = vmatprep.subr.mxu0 0.0
        %2169 = vmatpush1.msra.mxu0 0.0
        %2170 = vmatprep.subr.mxu0 0.0
        %2171 = vmatpush1.msra.mxu0 0.0
        %2172 = vmatprep.subr.mxu0 0.0
        %2173 = vmatpush1.msra.mxu0 0.0
        %2174 = vmatprep.subr.mxu0 0.0
        %2175 = vmatpush1.msra.mxu0 0.0
        %2176 = vmatprep.subr.mxu0 0.0
        %2177 = vmatpush1.msra.mxu0 0.0
        %2178 = vmatprep.subr.mxu0 0.0
        %2179 = vmatpush1.msra.mxu0 0.0
        %2180 = vmatprep.subr.mxu0 0.0
        %2181 = vmatpush1.msra.mxu0 0.0
        %2182 = vmatprep.subr.mxu0 0.0
        %2183 = vmatpush1.msra.mxu0 0.0
        %2184 = vmatprep.subr.mxu0 0.0
        %2185 = vmatpush1.msra.mxu0 0.0
        %2186 = vmatprep.mubr.f32.mxu0 0.0
        %2187 = vmatmul.mubr.f32.gmra.mrb[0].mxu0 %v2117
        %v2188 = vpop.f32.mrb[0].mxu0
        %v2189 = vadd.f32 %v2114, %v2188
        %v2190 = vpop.f32.mrb[0].mxu0
        %2191 = vmatprep.mubr.f32.mxu0 0.0
        %2192 = vmatmul.mubr.f32.gmra.mrb[0].mxu0 %v2120
        %v2193 = vpop.f32.mrb[0].mxu0
        %v2194 = vadd.f32 %v2114, %v2193
        %v2195 = vpop.f32.mrb[0].mxu0
        %2196 = vdwg.mxu0
        %v2197 = vadd.f32 %v650, %v2189
        %v2198 = vadd.f32 %v651, %v2194
        %v2199 = vld [vmem:[%s614] sm:$0x1]
        %v2200 = vld [vmem:[%s617] sm:$0x1]
        %v2201 = vsel %vm663, %v2197, 0.0
        %2202 = vadd.xlane.f32.xlu0 %v2201
        %v2203 = vpop.xlane.xlu0 %2202
        %v2204 = vsel %vm663, %v2198, 0.0
        %2205 = vadd.xlane.f32.xlu0 %v2204
        %v2206 = vpop.xlane.xlu0 %2205
        %v2207 = vrcp.pop 32.0
        %v2208 = vmul.f32 %v2203, %v2207
        %v2209 = vmul.f32 %v2206, %v2207
        %v2210 = vsub.f32 %v2197, %v2208
        %v2211 = vsub.f32 %v2198, %v2209
        %v2212 = vmul.f32 %v2210, %v2210
        %v2213 = vmul.f32 %v2211, %v2211
        %v2214 = vsel %vm663, %v2212, 0.0
        %2215 = vadd.xlane.f32.xlu0 %v2214
        %v2216 = vpop.xlane.xlu0 %2215
        %v2217 = vsel %vm663, %v2213, 0.0
        %2218 = vadd.xlane.f32.xlu0 %v2217
        %v2219 = vpop.xlane.xlu0 %2218
        %v2220 = vmul.f32 %v2216, %v2207
        %v2221 = vmul.f32 %v2219, %v2207
        %v2222 = vadd.f32 %v2220, 1e-05
        %v2223 = vadd.f32 %v2221, 1e-05
        %v2224 = vrsqrt.pop %v2222
        %v2225 = vrsqrt.pop %v2223
        %v2226 = vmul.f32 %v2210, %v2224
        %v2227 = vmul.f32 %v2211, %v2225
        %v2229 = vlaneseq
        %v2230 = vshrl.u32 %v2229, 7
        %v2231 = vsub.s32 0, %v2230
        %v2232 = vrot.slane %v2199, %v2231
        %v2234 = vmul.f32 %v2226, %v2232
        %v2235 = vmul.f32 %v2227, %v2232
        %v2237 = vlaneseq
        %v2238 = vshrl.u32 %v2237, 7
        %v2239 = vsub.s32 0, %v2238
        %v2240 = vrot.slane %v2200, %v2239
        %v2242 = vadd.f32 %v2234, %v2240
        %v2243 = vadd.f32 %v2235, %v2240
        %v2244 = vld [vmem:[%s628] sm:$0xff]
        %v2245 = vld [vmem:[%s628 + $0x8] sm:$0xff]
        %v2246 = vld [vmem:[%s628 + $0x10] sm:$0xff]
        %v2247 = vld [vmem:[%s628 + $0x18] sm:$0xff]
        %v2248 = vld [vmem:[%s631] sm:$0x1]
        %v2250 = vlaneseq
        %v2251 = vshrl.u32 %v2250, 7
        %v2252 = vsub.s32 0, %v2251
        %v2253 = vrot.slane %v2248, %v2252
        %v2256 = vsel %vm663, %v2242, 0
        %v2259 = vsel %vm663, %v2243, 0
        %2261 = vmatprep.subr.mxu0 0.0
        %2262 = vmatpush1.msra.mxu0 %v2244
        %2263 = vmatprep.subr.mxu0 0.0
        %2264 = vmatpush1.msra.mxu0 %v2245
        %2265 = vmatprep.subr.mxu0 0.0
        %2266 = vmatpush1.msra.mxu0 %v2246
        %2267 = vmatprep.subr.mxu0 0.0
        %2268 = vmatpush1.msra.mxu0 %v2247
        %2269 = vmatprep.subr.mxu0 0.0
        %2270 = vmatpush1.msra.mxu0 0.0
        %2271 = vmatprep.subr.mxu0 0.0
        %2272 = vmatpush1.msra.mxu0 0.0
        %2273 = vmatprep.subr.mxu0 0.0
        %2274 = vmatpush1.msra.mxu0 0.0
        %2275 = vmatprep.subr.mxu0 0.0
        %2276 = vmatpush1.msra.mxu0 0.0
        %2277 = vmatprep.subr.mxu0 0.0
        %2278 = vmatpush1.msra.mxu0 0.0
        %2279 = vmatprep.subr.mxu0 0.0
        %2280 = vmatpush1.msra.mxu0 0.0
        %2281 = vmatprep.subr.mxu0 0.0
        %2282 = vmatpush1.msra.mxu0 0.0
        %2283 = vmatprep.subr.mxu0 0.0
        %2284 = vmatpush1.msra.mxu0 0.0
        %2285 = vmatprep.subr.mxu0 0.0
        %2286 = vmatpush1.msra.mxu0 0.0
        %2287 = vmatprep.subr.mxu0 0.0
        %2288 = vmatpush1.msra.mxu0 0.0
        %2289 = vmatprep.subr.mxu0 0.0
        %2290 = vmatpush1.msra.mxu0 0.0
        %2291 = vmatprep.subr.mxu0 0.0
        %2292 = vmatpush1.msra.mxu0 0.0
        %2293 = vmatprep.subr.mxu0 0.0
        %2294 = vmatpush1.msra.mxu0 0.0
        %2295 = vmatprep.subr.mxu0 0.0
        %2296 = vmatpush1.msra.mxu0 0.0
        %2297 = vmatprep.subr.mxu0 0.0
        %2298 = vmatpush1.msra.mxu0 0.0
        %2299 = vmatprep.subr.mxu0 0.0
        %2300 = vmatpush1.msra.mxu0 0.0
        %2301 = vmatprep.subr.mxu0 0.0
        %2302 = vmatpush1.msra.mxu0 0.0
        %2303 = vmatprep.subr.mxu0 0.0
        %2304 = vmatpush1.msra.mxu0 0.0
        %2305 = vmatprep.subr.mxu0 0.0
        %2306 = vmatpush1.msra.mxu0 0.0
        %2307 = vmatprep.subr.mxu0 0.0
        %2308 = vmatpush1.msra.mxu0 0.0
        %2309 = vmatprep.subr.mxu0 0.0
        %2310 = vmatpush1.msra.mxu0 0.0
        %2311 = vmatprep.subr.mxu0 0.0
        %2312 = vmatpush1.msra.mxu0 0.0
        %2313 = vmatprep.subr.mxu0 0.0
        %2314 = vmatpush1.msra.mxu0 0.0
        %2315 = vmatprep.subr.mxu0 0.0
        %2316 = vmatpush1.msra.mxu0 0.0
        %2317 = vmatprep.subr.mxu0 0.0
        %2318 = vmatpush1.msra.mxu0 0.0
        %2319 = vmatprep.subr.mxu0 0.0
        %2320 = vmatpush1.msra.mxu0 0.0
        %2321 = vmatprep.subr.mxu0 0.0
        %2322 = vmatpush1.msra.mxu0 0.0
        %2323 = vmatprep.subr.mxu0 0.0
        %2324 = vmatpush1.msra.mxu0 0.0
        %2325 = vmatprep.mubr.f32.mxu0 0.0
        %2326 = vmatmul.mubr.f32.gmra.mrb[0].mxu0 %v2256
        %v2327 = vpop.f32.mrb[0].mxu0
        %v2328 = vadd.f32 %v2253, %v2327
        %v2329 = vpop.f32.mrb[0].mxu0
        %2330 = vmatprep.mubr.f32.mxu0 0.0
        %2331 = vmatmul.mubr.f32.gmra.mrb[0].mxu0 %v2259
        %v2332 = vpop.f32.mrb[0].mxu0
        %v2333 = vadd.f32 %v2253, %v2332
        %v2334 = vpop.f32.mrb[0].mxu0
        %2335 = vdwg.mxu0
        %v2336 = vmax.f32 %v2328, 0.0
        %v2337 = vmax.f32 %v2333, 0.0
        %v2338 = vld [vmem:[%s636] sm:$0xff]
        %v2339 = vld [vmem:[%s636 + $0x8] sm:$0xff]
        %v2340 = vld [vmem:[%s636 + $0x10] sm:$0xff]
        %v2341 = vld [vmem:[%s636 + $0x18] sm:$0xff]
        %v2342 = vld [vmem:[%s636 + $0x20] sm:$0xff]
        %v2343 = vld [vmem:[%s636 + $0x28] sm:$0xff]
        %v2344 = vld [vmem:[%s636 + $0x30] sm:$0xff]
        %v2345 = vld [vmem:[%s636 + $0x38] sm:$0xff]
        %v2346 = vld [vmem:[%s639] sm:$0x1]
        %v2348 = vlaneseq
        %v2349 = vshrl.u32 %v2348, 7
        %v2350 = vsub.s32 0, %v2349
        %v2351 = vrot.slane %v2346, %v2350
        %vm2353 = vcmask 523264
        %v2355 = vsel %vm2353, %v2336, 0
        %v2358 = vsel %vm2353, %v2337, 0
        %2360 = vmatprep.subr.mxu0 0.0
        %2361 = vmatpush1.msra.mxu0 %v2338
        %2362 = vmatprep.subr.mxu0 0.0
        %2363 = vmatpush1.msra.mxu0 %v2339
        %2364 = vmatprep.subr.mxu0 0.0
        %2365 = vmatpush1.msra.mxu0 %v2340
        %2366 = vmatprep.subr.mxu0 0.0
        %2367 = vmatpush1.msra.mxu0 %v2341
        %2368 = vmatprep.subr.mxu0 0.0
        %2369 = vmatpush1.msra.mxu0 %v2342
        %2370 = vmatprep.subr.mxu0 0.0
        %2371 = vmatpush1.msra.mxu0 %v2343
        %2372 = vmatprep.subr.mxu0 0.0
        %2373 = vmatpush1.msra.mxu0 %v2344
        %2374 = vmatprep.subr.mxu0 0.0
        %2375 = vmatpush1.msra.mxu0 %v2345
        %2376 = vmatprep.subr.mxu0 0.0
        %2377 = vmatpush1.msra.mxu0 0.0
        %2378 = vmatprep.subr.mxu0 0.0
        %2379 = vmatpush1.msra.mxu0 0.0
        %2380 = vmatprep.subr.mxu0 0.0
        %2381 = vmatpush1.msra.mxu0 0.0
        %2382 = vmatprep.subr.mxu0 0.0
        %2383 = vmatpush1.msra.mxu0 0.0
        %2384 = vmatprep.subr.mxu0 0.0
        %2385 = vmatpush1.msra.mxu0 0.0
        %2386 = vmatprep.subr.mxu0 0.0
        %2387 = vmatpush1.msra.mxu0 0.0
        %2388 = vmatprep.subr.mxu0 0.0
        %2389 = vmatpush1.msra.mxu0 0.0
        %2390 = vmatprep.subr.mxu0 0.0
        %2391 = vmatpush1.msra.mxu0 0.0
        %2392 = vmatprep.subr.mxu0 0.0
        %2393 = vmatpush1.msra.mxu0 0.0
        %2394 = vmatprep.subr.mxu0 0.0
        %2395 = vmatpush1.msra.mxu0 0.0
        %2396 = vmatprep.subr.mxu0 0.0
        %2397 = vmatpush1.msra.mxu0 0.0
        %2398 = vmatprep.subr.mxu0 0.0
        %2399 = vmatpush1.msra.mxu0 0.0
        %2400 = vmatprep.subr.mxu0 0.0
        %2401 = vmatpush1.msra.mxu0 0.0
        %2402 = vmatprep.subr.mxu0 0.0
        %2403 = vmatpush1.msra.mxu0 0.0
        %2404 = vmatprep.subr.mxu0 0.0
        %2405 = vmatpush1.msra.mxu0 0.0
        %2406 = vmatprep.subr.mxu0 0.0
        %2407 = vmatpush1.msra.mxu0 0.0
        %2408 = vmatprep.subr.mxu0 0.0
        %2409 = vmatpush1.msra.mxu0 0.0
        %2410 = vmatprep.subr.mxu0 0.0
        %2411 = vmatpush1.msra.mxu0 0.0
        %2412 = vmatprep.subr.mxu0 0.0
        %2413 = vmatpush1.msra.mxu0 0.0
        %2414 = vmatprep.subr.mxu0 0.0
        %2415 = vmatpush1.msra.mxu0 0.0
        %2416 = vmatprep.subr.mxu0 0.0
        %2417 = vmatpush1.msra.mxu0 0.0
        %2418 = vmatprep.subr.mxu0 0.0
        %2419 = vmatpush1.msra.mxu0 0.0
        %2420 = vmatprep.subr.mxu0 0.0
        %2421 = vmatpush1.msra.mxu0 0.0
        %2422 = vmatprep.subr.mxu0 0.0
        %2423 = vmatpush1.msra.mxu0 0.0
        %2424 = vmatprep.mubr.f32.mxu0 0.0
        %2425 = vmatmul.mubr.f32.gmra.mrb[0].mxu0 %v2355
        %v2426 = vpop.f32.mrb[0].mxu0
        %v2427 = vadd.f32 %v2351, %v2426
        %v2428 = vpop.f32.mrb[0].mxu0
        %2429 = vmatprep.mubr.f32.mxu0 0.0
        %2430 = vmatmul.mubr.f32.gmra.mrb[0].mxu0 %v2358
        %v2431 = vpop.f32.mrb[0].mxu0
        %v2432 = vadd.f32 %v2351, %v2431
        %v2433 = vpop.f32.mrb[0].mxu0
        %2434 = vdwg.mxu0
        %v2435 = vadd.f32 %v2242, %v2427
        %v2436 = vadd.f32 %v2243, %v2432
        %v2437 = vld [vmem:[%s620] sm:$0x1]
        %v2438 = vld [vmem:[%s623] sm:$0x1]
        %v2439 = vsel %vm663, %v2435, 0.0
        %2440 = vadd.xlane.f32.xlu0 %v2439
        %v2441 = vpop.xlane.xlu0 %2440
        %v2442 = vsel %vm663, %v2436, 0.0
        %2443 = vadd.xlane.f32.xlu0 %v2442
        %v2444 = vpop.xlane.xlu0 %2443
        %v2445 = vmul.f32 %v2441, %v2207
        %v2446 = vmul.f32 %v2444, %v2207
        %v2447 = vsub.f32 %v2435, %v2445
        %v2448 = vsub.f32 %v2436, %v2446
        %v2449 = vmul.f32 %v2447, %v2447
        %v2450 = vmul.f32 %v2448, %v2448
        %v2451 = vsel %vm663, %v2449, 0.0
        %2452 = vadd.xlane.f32.xlu0 %v2451
        %v2453 = vpop.xlane.xlu0 %2452
        %v2454 = vsel %vm663, %v2450, 0.0
        %2455 = vadd.xlane.f32.xlu0 %v2454
        %v2456 = vpop.xlane.xlu0 %2455
        %v2457 = vmul.f32 %v2453, %v2207
        %v2458 = vmul.f32 %v2456, %v2207
        %v2459 = vadd.f32 %v2457, 1e-05
        %v2460 = vadd.f32 %v2458, 1e-05
        %v2461 = vrsqrt.pop %v2459
        %v2462 = vrsqrt.pop %v2460
        %v2463 = vmul.f32 %v2447, %v2461
        %v2464 = vmul.f32 %v2448, %v2462
        %v2466 = vlaneseq
        %v2467 = vshrl.u32 %v2466, 7
        %v2468 = vsub.s32 0, %v2467
        %v2469 = vrot.slane %v2437, %v2468
        %v2471 = vmul.f32 %v2463, %v2469
        %v2472 = vmul.f32 %v2464, %v2469
        %v2474 = vlaneseq
        %v2475 = vshrl.u32 %v2474, 7
        %v2476 = vsub.s32 0, %v2475
        %v2477 = vrot.slane %v2438, %v2476
        %v2479 = vadd.f32 %v2471, %v2477
        %v2480 = vadd.f32 %v2472, %v2477
        %2481 = vst.msk [vmem:[#allocation2] sm:$0xff] %vm663, %v2479
        %2482 = vst.msk [vmem:[#allocation2 + $0x8] sm:$0xff] %vm663, %v2480
        %p2483 = scmp.eq.s32.totalorder %s31, 1
        // Predicated region
        $region81: #{tpu_custom_call.1} parent=71 // pred_check
          %p2484 = pneg %p2483
        $region82: #{tpu_custom_call.1} parent=71 // pred_check_branch
          %2486 = sbr.rel (%p2484) target = $region84
        $region83: #{tpu_custom_call.1} parent=71 // pred_region
          %v2487 = vld [vmem:[#allocation2] sm:$0xff]
          %v2488 = vld [vmem:[#allocation2 + $0x8] sm:$0xff]
          %2489 = vst.msk [vmem:[#allocation7] sm:$0xff] %vm663, %v2487
          %2490 = vst.msk [vmem:[#allocation7 + $0x8] sm:$0xff] %vm663, %v2488
        $region84: #{tpu_custom_call.1} parent=71 // pred_fallthru
          _
        // Predicated region
        $region85: #{tpu_custom_call.1} parent=71 // pred_check
          %p2491 = pneg %p394
        $region86: #{tpu_custom_call.1} parent=71 // pred_check_branch
          %2493 = sbr.rel (%p2491) target = $region88
        $region87: #{tpu_custom_call.1} parent=71 // pred_region
          %s2494 = smul.u32 2, %s30
          %s2496 = ssub.s32 256, 256
          %2497 = vsyncadd [#allocation6], %s2496
          %s2498 = smul.addr %s2494, 128
          %s2499 = scalar_lea.hbm %s13, %s2498
          %s2500 = sshll.u32 [#allocation7], 4
          %s2501 = int_to_ptr.vmem [resolvable:$true] %s2500
          %2506 = dma.vmem_to_hbm [thread:$0]  %s2501, 256, %s2499, [#allocation6], 128, 128, 8
        $region88: #{tpu_custom_call.1} parent=71 // pred_fallthru
          _
        // Predicated region
        $region89: #{tpu_custom_call.1} parent=71 // pred_check
          %p2507 = pneg %p394
        $region90: #{tpu_custom_call.1} parent=71 // pred_check_branch
          %2509 = sbr.rel (%p2507) target = $region92
        $region91: #{tpu_custom_call.1} parent=71 // pred_region
          %2510 = dma.done [#allocation6], 256
        $region92: #{tpu_custom_call.1} parent=71 // pred_fallthru
          _
      $region72: #{tpu_custom_call.1} parent=5 // pred_fallthru
        _
      %p2511 = scmp.le.s32.totalorder 2, %s21
      // Predicated region
      $region93: #{tpu_custom_call.1} parent=5 // pred_check
        %p2512 = pneg %p2511
      $region94: #{tpu_custom_call.1} parent=5 // pred_check_branch
        %2514 = sbr.rel (%p2512) target = $region96
      $region95: #{tpu_custom_call.1} parent=5 // pred_region
        %s2515 = ssub.s32 %s21, 2
      $region96: #{tpu_custom_call.1} parent=5 // pred_fallthru
        _
    $region6: #{tpu_custom_call.1} parent=1 // loop_footer
      %s25 = sadd.s32 1, %s21
    $region7: #{tpu_custom_call.1} parent=1 // loop_footer_branch
      %20 = sbr.rel target = $region3
    $region8: #{tpu_custom_call.1} parent=1 // loop_exit
      _
    %2516 = vsyncpa [#allocation5], 1
    %s2517 = scalar_lea.sflag [#allocation5], 1
    %2518 = vsyncpa %s2517, 1
    %2519 = vsyncpa [#allocation6], 1
    %s2520 = scalar_lea.sflag [#allocation6], 1
    %2521 = vsyncpa %s2520, 1

</llo_original>
